<compile_context>
chip_gen: v5e
topology: v5e:2x2
jax: 0.10.0
libtpu: 0.0.40
codegen_flags: <defaults>
</compile_context>

<pallas_src>
import jax
import jax.numpy as jnp
from jax import lax
from jax.experimental import pallas as pl
from jax.experimental.pallas import tpu as pltpu

# ---- small, module-consistent shapes ---------------------------------------
B, F, C, IMG = 2, 2, 3, 16         # batch, num_frames, channels, image size
PATCH = 8
NPATCH = (IMG // PATCH) ** 2       # 4 patches
S = NPATCH + 1                     # +1 CLS token -> ViT sequence length (5)
DH = 32                            # ViT hidden size (small stand-in for 768)
C1, C2 = 128, 64                   # conv1 / conv2 out channels (as in the module)
NHEAD = 8
HDIM = C2 // NHEAD                 # 8
OUT = 10                           # output_size
N = B * F                          # number of frames fed through the ViT
NS = N * S                         # stacked sequence length (all samples)
DQKV = 2 * C2 + NHEAD * C2         # fused projection width: Q | K | per-head V@Wo = 640


# ---------------------------------------------------------------------------
# Single fused Pallas kernel: conv1+relu -> conv2+relu -> 8-head self-attention
# (block-diagonal over samples, Wo folded into V) -> seq mean -> frame mean -> fc
# ---------------------------------------------------------------------------
def fused_kernel(h_ref, w1_ref, b1_ref, w2_ref, b2_ref,
                 wqkv_ref, bqkv_ref, wfc_ref, bfc_ref,
                 o_ref, pad_ref):
    # ---- index helpers, built in-kernel from iota + compares (no extra DMAs) ----
    row = lax.broadcasted_iota(jnp.int32, (NS, 1), 0)          # (NS, 1)
    col = lax.broadcasted_iota(jnp.int32, (1, NS), 1)          # (1, NS)
    sid_r = jnp.zeros((NS, 1), jnp.int32)                      # floor(i / S) without int div
    sid_c = jnp.zeros((1, NS), jnp.int32)
    for m in range(1, N):
        sid_r = sid_r + (row >= m * S).astype(jnp.int32)
        sid_c = sid_c + (col >= m * S).astype(jnp.int32)
    tok = row - sid_r * S                                      # i mod S
    nf = (tok != 0).astype(jnp.float32)                        # 0.0 on first token of each sample
    nl = (tok != S - 1).astype(jnp.float32)                    # 0.0 on last  token of each sample
    # block-diagonal additive bias: 0 within a sample, -1e9 across samples
    bias = jnp.where(sid_r == sid_c, 0.0, -1e9).astype(jnp.float32)       # (NS, NS)
    # pooling matrix: mean over S tokens of each frame, then mean over F frames
    bid_c = jnp.zeros((1, NS), jnp.int32)
    for m in range(1, B):
        bid_c = bid_c + (col >= m * (F * S)).astype(jnp.int32)
    brow = lax.broadcasted_iota(jnp.int32, (B, 1), 0)
    pool = jnp.where(brow == bid_c, 1.0 / (F * S), 0.0).astype(jnp.float32)  # (B, NS)

    # Zero ONLY the two slab-edge pad rows, once.  (Their taps are also masked by
    # nf/nl, but stale VMEM could hold NaNs and 0*NaN = NaN.)
    pad_ref[pl.ds(0, 1), :] = jnp.zeros((1, C1), jnp.float32)
    pad_ref[pl.ds(NS + 1, 1), :] = jnp.zeros((1, C1), jnp.float32)

    def conv_relu(inp, d, wcat_ref, b_ref):
        # Conv1d(k=3, padding=1) over the stacked sequence axis as ONE matmul: write the
        # activation into the row-padded scratch, read it back at sublane offsets 0 / 2
        # (the +/-1 row shifts), kill taps that would cross a sample boundary, and
        # contract the lane-concatenated [x_prev | x | x_next] with the fused weight.
        pad_ref[pl.ds(1, NS), pl.ds(0, d)] = inp
        xp = pad_ref[pl.ds(0, NS), pl.ds(0, d)] * nf           # x[i-1], zero at sample starts
        xn = pad_ref[pl.ds(2, NS), pl.ds(0, d)] * nl           # x[i+1], zero at sample ends
        xc = jnp.concatenate([xp, inp, xn], axis=-1)           # (NS, 3*d)
        y = jnp.dot(xc, wcat_ref[...], preferred_element_type=jnp.float32) + b_ref[...]
        return jnp.maximum(y, 0.0)

    x = h_ref[...]                                             # (NS, DH)
    x = conv_relu(x, DH, w1_ref, b1_ref)                       # (NS, C1)
    x = conv_relu(x, C1, w2_ref, b2_ref)                       # (NS, C2)

    # ---- MultiheadAttention(64, 8): one fused lane-dense projection --------------
    # columns: [0:64]   = Q (1/sqrt(HDIM) folded in)
    #          [64:128] = K
    #          [128:640]= per-head V @ Wo  (output projection folded into V)
    qkv = jnp.dot(x, wqkv_ref[...], preferred_element_type=jnp.float32) + bqkv_ref[...]

    attn = jnp.zeros((NS, C2), jnp.float32)
    for h in range(NHEAD):
        qh = qkv[:, h * HDIM:(h + 1) * HDIM]                   # (NS, 8)
        kh = qkv[:, C2 + h * HDIM: C2 + (h + 1) * HDIM]        # (NS, 8)
        vh = qkv[:, 2 * C2 + h * C2: 2 * C2 + (h + 1) * C2]    # (NS, 64) = V_h @ Wo_h
        s = lax.dot_general(qh, kh, (((1,), (1,)), ((), ())),
                            preferred_element_type=jnp.float32)  # (NS, NS) = q @ k.T
        s = s + bias                                           # no cross-sample attention
        s = s - jnp.max(s, axis=-1, keepdims=True)
        p = jnp.exp(s)
        p = p / jnp.sum(p, axis=-1, keepdims=True)             # exact reciprocal
        attn = attn + jnp.dot(p, vh, preferred_element_type=jnp.float32)

    # mean over tokens then mean over frames (== pool @ attn); bo is folded into bfc.
    pooled = jnp.dot(pool, attn, preferred_element_type=jnp.float32)          # (B, C2)
    o_ref[...] = (jnp.dot(pooled, wfc_ref[...], preferred_element_type=jnp.float32)
                  + bfc_ref[...])                                             # (B, OUT)


# ---------------------------------------------------------------------------
# Glue: deterministic ViT stand-in (patch embedding + CLS + pos-emb)
# ---------------------------------------------------------------------------
def vit_stub(frames, p):
    # frames: (N, C, IMG, IMG) NCHW, like PyTorch's pixel_values
    n = frames.shape[0]
    patches = frames.reshape(n, C, IMG // PATCH, PATCH, IMG // PATCH, PATCH)
    patches = patches.transpose(0, 2, 4, 1, 3, 5).reshape(n, NPATCH, C * PATCH * PATCH)
    emb = patches @ p['patch_w']                               # (N, NPATCH, DH)
    cls = jnp.broadcast_to(p['cls'], (n, 1, DH))
    return jnp.concatenate([cls, emb], axis=1) + p['pos']      # (N, S, DH)


@jax.jit
def pallas_forward(x, p):
    frames = x.reshape(N, C, IMG, IMG)
    hidden = vit_stub(frames, p)                               # (N, S, DH) last_hidden_state
    h2d = hidden.reshape(NS, DH)                               # all samples stacked row-wise

    # Fused conv weights: [W_prev; W_center; W_next] stacked along the contraction dim.
    w1c = p['w1'].reshape(3 * DH, C1)
    w2c = p['w2'].reshape(3 * C1, C2)

    # Fused attention projection [Q*scale | K | per-head V@Wo], with matching bias.
    scale = 1.0 / (HDIM ** 0.5)
    wq = p['wqkv'][:, 0:C2] * scale
    wk = p['wqkv'][:, C2:2 * C2]
    wv = p['wqkv'][:, 2 * C2:3 * C2]
    bq = p['bqkv'][0, 0:C2] * scale
    bk = p['bqkv'][0, C2:2 * C2]
    bv = p['bqkv'][0, 2 * C2:3 * C2]
    wo_h = p['wo'].reshape(NHEAD, HDIM, C2)                    # (H, HDIM, C2)
    wv_eff = jnp.einsum('chd,hdo->cho', wv.reshape(C2, NHEAD, HDIM),
                        wo_h).reshape(C2, NHEAD * C2)          # (C2, 512)
    bv_eff = jnp.einsum('hd,hdo->ho', bv.reshape(NHEAD, HDIM),
                        wo_h).reshape(NHEAD * C2)              # (512,)
    w_attn = jnp.concatenate([wq, wk, wv_eff], axis=1)         # (C2, 640)
    b_attn = jnp.concatenate([bq, bk, bv_eff]).reshape(1, DQKV)

    # attention output bias folds through the (linear) means into the fc bias.
    bfc_eff = p['bo'] @ p['wfc'] + p['bfc']                    # (1, OUT)

    # Single invocation (no grid): every operand fits VMEM whole (default full-array
    # blocks); masks/bias/pooling are built in-kernel, so only 9 operand DMAs remain.
    return pl.pallas_call(
        fused_kernel,
        out_shape=jax.ShapeDtypeStruct((B, OUT), jnp.float32),
        scratch_shapes=[pltpu.VMEM((NS + 2, C1), jnp.float32)],
    )(h2d, w1c, p['b1'], w2c, p['b2'], w_attn, b_attn, p['wfc'], bfc_eff)


# ---------------------------------------------------------------------------
# Pure-JAX reference for correctness checking
# ---------------------------------------------------------------------------
def reference_forward(x, p):
    frames = x.reshape(N, C, IMG, IMG)
    h = vit_stub(frames, p)

    def conv_relu(h, w, b):
        hp = jnp.concatenate([jnp.zeros_like(h[:, :1]), h[:, :-1]], axis=1)
        hn = jnp.concatenate([h[:, 1:], jnp.zeros_like(h[:, :1])], axis=1)
        y = (jnp.einsum('nsc,co->nso', hp, w[0])
             + jnp.einsum('nsc,co->nso', h, w[1])
             + jnp.einsum('nsc,co->nso', hn, w[2]) + b)
        return jnp.maximum(y, 0.0)

    h1 = conv_relu(h, p['w1'], p['b1'])
    h2 = conv_relu(h1, p['w2'], p['b2'])

    qkv = jnp.einsum('nse,ef->nsf', h2, p['wqkv']) + p['bqkv']
    q, k, v = jnp.split(qkv, 3, axis=-1)
    q = q.reshape(N, S, NHEAD, HDIM)
    k = k.reshape(N, S, NHEAD, HDIM)
    v = v.reshape(N, S, NHEAD, HDIM)
    s = jnp.einsum('nshd,nthd->nhst', q, k) / (HDIM ** 0.5)
    a = jax.nn.softmax(s, axis=-1)
    o = jnp.einsum('nhst,nthd->nshd', a, v).reshape(N, S, C2)
    o = jnp.einsum('nse,ef->nsf', o, p['wo']) + p['bo']
    feats = o.mean(axis=1)
    pooled = feats.reshape(B, F, C2).mean(axis=1)
    return pooled @ p['wfc'] + p['bfc']


def init_params(key):
    ks = jax.random.split(key, 13)
    sc = 0.05
    return {
        'patch_w': sc * jax.random.normal(ks[0], (C * PATCH * PATCH, DH), jnp.float32),
        'cls':     sc * jax.random.normal(ks[1], (1, 1, DH), jnp.float32),
        'pos':     sc * jax.random.normal(ks[2], (1, S, DH), jnp.float32),
        'w1':      sc * jax.random.normal(ks[3], (3, DH, C1), jnp.float32),
        'b1':      sc * jax.random.normal(ks[4], (1, C1), jnp.float32),
        'w2':      sc * jax.random.normal(ks[5], (3, C1, C2), jnp.float32),
        'b2':      sc * jax.random.normal(ks[6], (1, C2), jnp.float32),
        'wqkv':    sc * jax.random.normal(ks[7], (C2, 3 * C2), jnp.float32),
        'bqkv':    sc * jax.random.normal(ks[8], (1, 3 * C2), jnp.float32),
        'wo':      sc * jax.random.normal(ks[9], (C2, C2), jnp.float32),
        'bo':      sc * jax.random.normal(ks[10], (1, C2), jnp.float32),
        'wfc':     sc * jax.random.normal(ks[11], (C2, OUT), jnp.float32),
        'bfc':     sc * jax.random.normal(ks[12], (1, OUT), jnp.float32),
    }


if __name__ == "__main__":
    key = jax.random.PRNGKey(0)
    kx, kp = jax.random.split(key)
    x = jax.random.normal(kx, (B, F, C, IMG, IMG), jnp.float32)
    params = init_params(kp)

    out = pallas_forward(x, params)
    out = jax.block_until_ready(out)

    ref = reference_forward(x, params)
    assert out.shape == (B, OUT), out.shape
    assert bool(jnp.allclose(out, ref, rtol=2e-3, atol=2e-3)), "mismatch vs reference"
    print("KERNEL_OK")
</pallas_src>

<mosaic_0001>
module attributes {stable_mosaic.version = 11 : i64} {
  func.func @fused_kernel(%arg0: memref<20x32xf32, #tpu.memory_space<vmem>>, %arg1: memref<96x128xf32, #tpu.memory_space<vmem>>, %arg2: memref<1x128xf32, #tpu.memory_space<vmem>>, %arg3: memref<384x64xf32, #tpu.memory_space<vmem>>, %arg4: memref<1x64xf32, #tpu.memory_space<vmem>>, %arg5: memref<64x640xf32, #tpu.memory_space<vmem>>, %arg6: memref<1x640xf32, #tpu.memory_space<vmem>>, %arg7: memref<64x10xf32, #tpu.memory_space<vmem>>, %arg8: memref<1x10xf32, #tpu.memory_space<vmem>>, %arg9: memref<2x10xf32, #tpu.memory_space<vmem>>, %arg10: memref<22x128xf32, #tpu.memory_space<vmem>>) attributes {dimension_semantics = [], scalar_prefetch = 0 : i64, scratch_operands = 1 : i64, tpu.core_type = #tpu.core_type<tc>} {
    %0 = tpu.iota {dimensions = array<i32: 0>} : vector<20x1xi32>
    %1 = tpu.iota {dimensions = array<i32: 1>} : vector<1x20xi32>
    %c0_i32 = arith.constant 0 : i32
    %2 = vector.broadcast %c0_i32 : i32 to vector<20x1xi32>
    %c0_i32_0 = arith.constant 0 : i32
    %3 = vector.broadcast %c0_i32_0 : i32 to vector<1x20xi32>
    %c5_i32 = arith.constant 5 : i32
    %4 = vector.broadcast %c5_i32 : i32 to vector<20x1xi32>
    %5 = arith.cmpi sge, %0, %4 : vector<20x1xi32>
    %6 = arith.extui %5 : vector<20x1xi1> to vector<20x1xi32>
    %7 = arith.addi %2, %6 : vector<20x1xi32>
    %c5_i32_1 = arith.constant 5 : i32
    %8 = vector.broadcast %c5_i32_1 : i32 to vector<1x20xi32>
    %9 = arith.cmpi sge, %1, %8 : vector<1x20xi32>
    %10 = arith.extui %9 : vector<1x20xi1> to vector<1x20xi32>
    %11 = arith.addi %3, %10 : vector<1x20xi32>
    %c10_i32 = arith.constant 10 : i32
    %12 = vector.broadcast %c10_i32 : i32 to vector<20x1xi32>
    %13 = arith.cmpi sge, %0, %12 : vector<20x1xi32>
    %14 = arith.extui %13 : vector<20x1xi1> to vector<20x1xi32>
    %15 = arith.addi %7, %14 : vector<20x1xi32>
    %c10_i32_2 = arith.constant 10 : i32
    %16 = vector.broadcast %c10_i32_2 : i32 to vector<1x20xi32>
    %17 = arith.cmpi sge, %1, %16 : vector<1x20xi32>
    %18 = arith.extui %17 : vector<1x20xi1> to vector<1x20xi32>
    %19 = arith.addi %11, %18 : vector<1x20xi32>
    %c15_i32 = arith.constant 15 : i32
    %20 = vector.broadcast %c15_i32 : i32 to vector<20x1xi32>
    %21 = arith.cmpi sge, %0, %20 : vector<20x1xi32>
    %22 = arith.extui %21 : vector<20x1xi1> to vector<20x1xi32>
    %23 = arith.addi %15, %22 : vector<20x1xi32>
    %c15_i32_3 = arith.constant 15 : i32
    %24 = vector.broadcast %c15_i32_3 : i32 to vector<1x20xi32>
    %25 = arith.cmpi sge, %1, %24 : vector<1x20xi32>
    %26 = arith.extui %25 : vector<1x20xi1> to vector<1x20xi32>
    %27 = arith.addi %19, %26 : vector<1x20xi32>
    %c5_i32_4 = arith.constant 5 : i32
    %28 = vector.broadcast %c5_i32_4 : i32 to vector<20x1xi32>
    %29 = arith.muli %23, %28 : vector<20x1xi32>
    %30 = arith.subi %0, %29 : vector<20x1xi32>
    %c0_i32_5 = arith.constant 0 : i32
    %31 = vector.broadcast %c0_i32_5 : i32 to vector<20x1xi32>
    %32 = arith.cmpi ne, %30, %31 : vector<20x1xi32>
    %33 = arith.extui %32 : vector<20x1xi1> to vector<20x1xi32>
    %34 = arith.sitofp %33 : vector<20x1xi32> to vector<20x1xf32>
    %c4_i32 = arith.constant 4 : i32
    %35 = vector.broadcast %c4_i32 : i32 to vector<20x1xi32>
    %36 = arith.cmpi ne, %30, %35 : vector<20x1xi32>
    %37 = arith.extui %36 : vector<20x1xi1> to vector<20x1xi32>
    %38 = arith.sitofp %37 : vector<20x1xi32> to vector<20x1xf32>
    %39 = vector.broadcast %23 : vector<20x1xi32> to vector<20x20xi32>
    %40 = vector.broadcast %27 : vector<1x20xi32> to vector<20x20xi32>
    %41 = arith.cmpi eq, %39, %40 : vector<20x20xi32>
    %cst = arith.constant 0.000000e+00 : f32
    %cst_6 = arith.constant -1.000000e+09 : f32
    %42 = vector.broadcast %cst : f32 to vector<20x20xf32>
    %43 = vector.broadcast %cst_6 : f32 to vector<20x20xf32>
    %44 = arith.select %41, %42, %43 : vector<20x20xi1>, vector<20x20xf32>
    %c0_i32_7 = arith.constant 0 : i32
    %45 = vector.broadcast %c0_i32_7 : i32 to vector<1x20xi32>
    %c10_i32_8 = arith.constant 10 : i32
    %46 = vector.broadcast %c10_i32_8 : i32 to vector<1x20xi32>
    %47 = arith.cmpi sge, %1, %46 : vector<1x20xi32>
    %48 = arith.extui %47 : vector<1x20xi1> to vector<1x20xi32>
    %49 = arith.addi %45, %48 : vector<1x20xi32>
    %50 = tpu.iota {dimensions = array<i32: 0>} : vector<2x1xi32>
    %51 = vector.broadcast %50 : vector<2x1xi32> to vector<2x20xi32>
    %52 = vector.broadcast %49 : vector<1x20xi32> to vector<2x20xi32>
    %53 = arith.cmpi eq, %51, %52 : vector<2x20xi32>
    %cst_9 = arith.constant 1.000000e-01 : f32
    %cst_10 = arith.constant 0.000000e+00 : f32
    %54 = vector.broadcast %cst_9 : f32 to vector<2x20xf32>
    %55 = vector.broadcast %cst_10 : f32 to vector<2x20xf32>
    %56 = arith.select %53, %54, %55 : vector<2x20xi1>, vector<2x20xf32>
    %cst_11 = arith.constant 0.000000e+00 : f32
    %57 = vector.broadcast %cst_11 : f32 to vector<1x128xf32>
    %c0 = arith.constant 0 : index
    %c0_12 = arith.constant 0 : index
    %58 = vector.load %arg10[%c0, %c0_12] : memref<22x128xf32, #tpu.memory_space<vmem>>, vector<1x128xf32>
    tpu.vector_store %arg10[%c0, %c0_12], %57 {strides = array<i32>} : memref<22x128xf32, #tpu.memory_space<vmem>>, vector<1x128xf32>,
    %cst_13 = arith.constant 0.000000e+00 : f32
    %59 = vector.broadcast %cst_13 : f32 to vector<1x128xf32>
    %c21 = arith.constant 21 : index
    %c0_14 = arith.constant 0 : index
    %60 = vector.load %arg10[%c21, %c0_14] : memref<22x128xf32, #tpu.memory_space<vmem>>, vector<1x128xf32>
    tpu.vector_store %arg10[%c21, %c0_14], %59 {strides = array<i32>} : memref<22x128xf32, #tpu.memory_space<vmem>>, vector<1x128xf32>,
    %c0_15 = arith.constant 0 : index
    %c0_16 = arith.constant 0 : index
    %61 = vector.load %arg0[%c0_15, %c0_16] : memref<20x32xf32, #tpu.memory_space<vmem>>, vector<20x32xf32>
    %c1 = arith.constant 1 : index
    %c0_17 = arith.constant 0 : index
    %62 = vector.load %arg10[%c1, %c0_17] : memref<22x128xf32, #tpu.memory_space<vmem>>, vector<20x32xf32>
    tpu.vector_store %arg10[%c1, %c0_17], %61 {strides = array<i32>} : memref<22x128xf32, #tpu.memory_space<vmem>>, vector<20x32xf32>,
    %c0_18 = arith.constant 0 : index
    %c0_19 = arith.constant 0 : index
    %63 = vector.load %arg10[%c0_18, %c0_19] : memref<22x128xf32, #tpu.memory_space<vmem>>, vector<20x32xf32>
    %64 = vector.broadcast %34 : vector<20x1xf32> to vector<20x32xf32>
    %65 = arith.mulf %63, %64 : vector<20x32xf32>
    %c2 = arith.constant 2 : index
    %c0_20 = arith.constant 0 : index
    %66 = vector.load %arg10[%c2, %c0_20] : memref<22x128xf32, #tpu.memory_space<vmem>>, vector<20x32xf32>
    %67 = vector.broadcast %38 : vector<20x1xf32> to vector<20x32xf32>
    %68 = arith.mulf %66, %67 : vector<20x32xf32>
    %69 = tpu.concatenate %65, %61, %68 in 1 : vector<20x32xf32>, vector<20x32xf32>, vector<20x32xf32> -> vector<20x96xf32>
    %c0_21 = arith.constant 0 : index
    %c0_22 = arith.constant 0 : index
    %70 = vector.load %arg1[%c0_21, %c0_22] : memref<96x128xf32, #tpu.memory_space<vmem>>, vector<96x128xf32>
    %cst_23 = arith.constant dense<0.000000e+00> : vector<20x128xf32>
    %71 = tpu.matmul %69, %70, %cst_23 {dimension_numbers = #tpu.dot_dimension_numbers<[1], [0], [0], [1], [0, 0, 1, 1], [], []>} : vector<20x96xf32>, vector<96x128xf32>, vector<20x128xf32> -> vector<20x128xf32>
    %c0_24 = arith.constant 0 : index
    %c0_25 = arith.constant 0 : index
    %72 = vector.load %arg2[%c0_24, %c0_25] : memref<1x128xf32, #tpu.memory_space<vmem>>, vector<1x128xf32>
    %73 = vector.broadcast %72 : vector<1x128xf32> to vector<20x128xf32>
    %74 = arith.addf %71, %73 : vector<20x128xf32>
    %cst_26 = arith.constant 0.000000e+00 : f32
    %75 = vector.broadcast %cst_26 : f32 to vector<20x128xf32>
    %76 = arith.maximumf %74, %75 : vector<20x128xf32>
    %c1_27 = arith.constant 1 : index
    %c0_28 = arith.constant 0 : index
    %77 = vector.load %arg10[%c1_27, %c0_28] : memref<22x128xf32, #tpu.memory_space<vmem>>, vector<20x128xf32>
    tpu.vector_store %arg10[%c1_27, %c0_28], %76 {strides = array<i32>} : memref<22x128xf32, #tpu.memory_space<vmem>>, vector<20x128xf32>,
    %c0_29 = arith.constant 0 : index
    %c0_30 = arith.constant 0 : index
    %78 = vector.load %arg10[%c0_29, %c0_30] : memref<22x128xf32, #tpu.memory_space<vmem>>, vector<20x128xf32>
    %79 = vector.broadcast %34 : vector<20x1xf32> to vector<20x128xf32>
    %80 = arith.mulf %78, %79 : vector<20x128xf32>
    %c2_31 = arith.constant 2 : index
    %c0_32 = arith.constant 0 : index
    %81 = vector.load %arg10[%c2_31, %c0_32] : memref<22x128xf32, #tpu.memory_space<vmem>>, vector<20x128xf32>
    %82 = vector.broadcast %38 : vector<20x1xf32> to vector<20x128xf32>
    %83 = arith.mulf %81, %82 : vector<20x128xf32>
    %84 = tpu.concatenate %80, %76, %83 in 1 : vector<20x128xf32>, vector<20x128xf32>, vector<20x128xf32> -> vector<20x384xf32>
    %c0_33 = arith.constant 0 : index
    %c0_34 = arith.constant 0 : index
    %85 = vector.load %arg3[%c0_33, %c0_34] : memref<384x64xf32, #tpu.memory_space<vmem>>, vector<384x64xf32>
    %cst_35 = arith.constant dense<0.000000e+00> : vector<20x64xf32>
    %86 = tpu.matmul %84, %85, %cst_35 {dimension_numbers = #tpu.dot_dimension_numbers<[1], [0], [0], [1], [0, 0, 1, 1], [], []>} : vector<20x384xf32>, vector<384x64xf32>, vector<20x64xf32> -> vector<20x64xf32>
    %c0_36 = arith.constant 0 : index
    %c0_37 = arith.constant 0 : index
    %87 = vector.load %arg4[%c0_36, %c0_37] : memref<1x64xf32, #tpu.memory_space<vmem>>, vector<1x64xf32>
    %88 = vector.broadcast %87 : vector<1x64xf32> to vector<20x64xf32>
    %89 = arith.addf %86, %88 : vector<20x64xf32>
    %cst_38 = arith.constant 0.000000e+00 : f32
    %90 = vector.broadcast %cst_38 : f32 to vector<20x64xf32>
    %91 = arith.maximumf %89, %90 : vector<20x64xf32>
    %c0_39 = arith.constant 0 : index
    %c0_40 = arith.constant 0 : index
    %92 = vector.load %arg5[%c0_39, %c0_40] : memref<64x640xf32, #tpu.memory_space<vmem>>, vector<64x640xf32>
    %cst_41 = arith.constant dense<0.000000e+00> : vector<20x640xf32>
    %93 = tpu.matmul %91, %92, %cst_41 {dimension_numbers = #tpu.dot_dimension_numbers<[1], [0], [0], [1], [0, 0, 1, 1], [], []>} : vector<20x64xf32>, vector<64x640xf32>, vector<20x640xf32> -> vector<20x640xf32>
    %c0_42 = arith.constant 0 : index
    %c0_43 = arith.constant 0 : index
    %94 = vector.load %arg6[%c0_42, %c0_43] : memref<1x640xf32, #tpu.memory_space<vmem>>, vector<1x640xf32>
    %95 = vector.broadcast %94 : vector<1x640xf32> to vector<20x640xf32>
    %96 = arith.addf %93, %95 : vector<20x640xf32>
    %cst_44 = arith.constant 0.000000e+00 : f32
    %97 = vector.broadcast %cst_44 : f32 to vector<20x64xf32>
    %98 = vector.extract_strided_slice %96 {offsets = [0, 0], sizes = [20, 8], strides = [1, 1]} : vector<20x640xf32> to vector<20x8xf32>
    %99 = vector.extract_strided_slice %96 {offsets = [0, 64], sizes = [20, 8], strides = [1, 1]} : vector<20x640xf32> to vector<20x8xf32>
    %100 = vector.extract_strided_slice %96 {offsets = [0, 128], sizes = [20, 64], strides = [1, 1]} : vector<20x640xf32> to vector<20x64xf32>
    %cst_45 = arith.constant dense<0.000000e+00> : vector<20x20xf32>
    %101 = tpu.matmul %98, %99, %cst_45 {dimension_numbers = #tpu.dot_dimension_numbers<[1], [1], [0], [0], [0, 0, 1, 0], [], []>} : vector<20x8xf32>, vector<20x8xf32>, vector<20x20xf32> -> vector<20x20xf32>
    %102 = arith.addf %101, %44 : vector<20x20xf32>
    %cst_46 = arith.constant dense<0xFF800000> : vector<20xf32>
    %103 = vector.multi_reduction <maximumf>, %102, %cst_46 [1] : vector<20x20xf32> to vector<20xf32>
    %104 = vector.shape_cast %103 : vector<20xf32> to vector<20x1xf32>
    %105 = vector.broadcast %104 : vector<20x1xf32> to vector<20x20xf32>
    %106 = arith.subf %102, %105 : vector<20x20xf32>
    %107 = math.exp %106 : vector<20x20xf32>
    %cst_47 = arith.constant dense<0.000000e+00> : vector<20xf32>
    %108 = vector.multi_reduction <add>, %107, %cst_47 [1] : vector<20x20xf32> to vector<20xf32>
    %109 = vector.shape_cast %108 : vector<20xf32> to vector<20x1xf32>
    %110 = vector.broadcast %109 : vector<20x1xf32> to vector<20x20xf32>
    %111 = arith.divf %107, %110 : vector<20x20xf32>
    %cst_48 = arith.constant dense<0.000000e+00> : vector<20x64xf32>
    %112 = tpu.matmul %111, %100, %cst_48 {dimension_numbers = #tpu.dot_dimension_numbers<[1], [0], [0], [1], [0, 0, 1, 1], [], []>} : vector<20x20xf32>, vector<20x64xf32>, vector<20x64xf32> -> vector<20x64xf32>
    %113 = arith.addf %97, %112 : vector<20x64xf32>
    %114 = vector.extract_strided_slice %96 {offsets = [0, 8], sizes = [20, 8], strides = [1, 1]} : vector<20x640xf32> to vector<20x8xf32>
    %115 = vector.extract_strided_slice %96 {offsets = [0, 72], sizes = [20, 8], strides = [1, 1]} : vector<20x640xf32> to vector<20x8xf32>
    %116 = vector.extract_strided_slice %96 {offsets = [0, 192], sizes = [20, 64], strides = [1, 1]} : vector<20x640xf32> to vector<20x64xf32>
    %cst_49 = arith.constant dense<0.000000e+00> : vector<20x20xf32>
    %117 = tpu.matmul %114, %115, %cst_49 {dimension_numbers = #tpu.dot_dimension_numbers<[1], [1], [0], [0], [0, 0, 1, 0], [], []>} : vector<20x8xf32>, vector<20x8xf32>, vector<20x20xf32> -> vector<20x20xf32>
    %118 = arith.addf %117, %44 : vector<20x20xf32>
    %cst_50 = arith.constant dense<0xFF800000> : vector<20xf32>
    %119 = vector.multi_reduction <maximumf>, %118, %cst_50 [1] : vector<20x20xf32> to vector<20xf32>
    %120 = vector.shape_cast %119 : vector<20xf32> to vector<20x1xf32>
    %121 = vector.broadcast %120 : vector<20x1xf32> to vector<20x20xf32>
    %122 = arith.subf %118, %121 : vector<20x20xf32>
    %123 = math.exp %122 : vector<20x20xf32>
    %cst_51 = arith.constant dense<0.000000e+00> : vector<20xf32>
    %124 = vector.multi_reduction <add>, %123, %cst_51 [1] : vector<20x20xf32> to vector<20xf32>
    %125 = vector.shape_cast %124 : vector<20xf32> to vector<20x1xf32>
    %126 = vector.broadcast %125 : vector<20x1xf32> to vector<20x20xf32>
    %127 = arith.divf %123, %126 : vector<20x20xf32>
    %cst_52 = arith.constant dense<0.000000e+00> : vector<20x64xf32>
    %128 = tpu.matmul %127, %116, %cst_52 {dimension_numbers = #tpu.dot_dimension_numbers<[1], [0], [0], [1], [0, 0, 1, 1], [], []>} : vector<20x20xf32>, vector<20x64xf32>, vector<20x64xf32> -> vector<20x64xf32>
    %129 = arith.addf %113, %128 : vector<20x64xf32>
    %130 = vector.extract_strided_slice %96 {offsets = [0, 16], sizes = [20, 8], strides = [1, 1]} : vector<20x640xf32> to vector<20x8xf32>
    %131 = vector.extract_strided_slice %96 {offsets = [0, 80], sizes = [20, 8], strides = [1, 1]} : vector<20x640xf32> to vector<20x8xf32>
    %132 = vector.extract_strided_slice %96 {offsets = [0, 256], sizes = [20, 64], strides = [1, 1]} : vector<20x640xf32> to vector<20x64xf32>
    %cst_53 = arith.constant dense<0.000000e+00> : vector<20x20xf32>
    %133 = tpu.matmul %130, %131, %cst_53 {dimension_numbers = #tpu.dot_dimension_numbers<[1], [1], [0], [0], [0, 0, 1, 0], [], []>} : vector<20x8xf32>, vector<20x8xf32>, vector<20x20xf32> -> vector<20x20xf32>
    %134 = arith.addf %133, %44 : vector<20x20xf32>
    %cst_54 = arith.constant dense<0xFF800000> : vector<20xf32>
    %135 = vector.multi_reduction <maximumf>, %134, %cst_54 [1] : vector<20x20xf32> to vector<20xf32>
    %136 = vector.shape_cast %135 : vector<20xf32> to vector<20x1xf32>
    %137 = vector.broadcast %136 : vector<20x1xf32> to vector<20x20xf32>
    %138 = arith.subf %134, %137 : vector<20x20xf32>
    %139 = math.exp %138 : vector<20x20xf32>
    %cst_55 = arith.constant dense<0.000000e+00> : vector<20xf32>
    %140 = vector.multi_reduction <add>, %139, %cst_55 [1] : vector<20x20xf32> to vector<20xf32>
    %141 = vector.shape_cast %140 : vector<20xf32> to vector<20x1xf32>
    %142 = vector.broadcast %141 : vector<20x1xf32> to vector<20x20xf32>
    %143 = arith.divf %139, %142 : vector<20x20xf32>
    %cst_56 = arith.constant dense<0.000000e+00> : vector<20x64xf32>
    %144 = tpu.matmul %143, %132, %cst_56 {dimension_numbers = #tpu.dot_dimension_numbers<[1], [0], [0], [1], [0, 0, 1, 1], [], []>} : vector<20x20xf32>, vector<20x64xf32>, vector<20x64xf32> -> vector<20x64xf32>
    %145 = arith.addf %129, %144 : vector<20x64xf32>
    %146 = vector.extract_strided_slice %96 {offsets = [0, 24], sizes = [20, 8], strides = [1, 1]} : vector<20x640xf32> to vector<20x8xf32>
    %147 = vector.extract_strided_slice %96 {offsets = [0, 88], sizes = [20, 8], strides = [1, 1]} : vector<20x640xf32> to vector<20x8xf32>
    %148 = vector.extract_strided_slice %96 {offsets = [0, 320], sizes = [20, 64], strides = [1, 1]} : vector<20x640xf32> to vector<20x64xf32>
    %cst_57 = arith.constant dense<0.000000e+00> : vector<20x20xf32>
    %149 = tpu.matmul %146, %147, %cst_57 {dimension_numbers = #tpu.dot_dimension_numbers<[1], [1], [0], [0], [0, 0, 1, 0], [], []>} : vector<20x8xf32>, vector<20x8xf32>, vector<20x20xf32> -> vector<20x20xf32>
    %150 = arith.addf %149, %44 : vector<20x20xf32>
    %cst_58 = arith.constant dense<0xFF800000> : vector<20xf32>
    %151 = vector.multi_reduction <maximumf>, %150, %cst_58 [1] : vector<20x20xf32> to vector<20xf32>
    %152 = vector.shape_cast %151 : vector<20xf32> to vector<20x1xf32>
    %153 = vector.broadcast %152 : vector<20x1xf32> to vector<20x20xf32>
    %154 = arith.subf %150, %153 : vector<20x20xf32>
    %155 = math.exp %154 : vector<20x20xf32>
    %cst_59 = arith.constant dense<0.000000e+00> : vector<20xf32>
    %156 = vector.multi_reduction <add>, %155, %cst_59 [1] : vector<20x20xf32> to vector<20xf32>
    %157 = vector.shape_cast %156 : vector<20xf32> to vector<20x1xf32>
    %158 = vector.broadcast %157 : vector<20x1xf32> to vector<20x20xf32>
    %159 = arith.divf %155, %158 : vector<20x20xf32>
    %cst_60 = arith.constant dense<0.000000e+00> : vector<20x64xf32>
    %160 = tpu.matmul %159, %148, %cst_60 {dimension_numbers = #tpu.dot_dimension_numbers<[1], [0], [0], [1], [0, 0, 1, 1], [], []>} : vector<20x20xf32>, vector<20x64xf32>, vector<20x64xf32> -> vector<20x64xf32>
    %161 = arith.addf %145, %160 : vector<20x64xf32>
    %162 = vector.extract_strided_slice %96 {offsets = [0, 32], sizes = [20, 8], strides = [1, 1]} : vector<20x640xf32> to vector<20x8xf32>
    %163 = vector.extract_strided_slice %96 {offsets = [0, 96], sizes = [20, 8], strides = [1, 1]} : vector<20x640xf32> to vector<20x8xf32>
    %164 = vector.extract_strided_slice %96 {offsets = [0, 384], sizes = [20, 64], strides = [1, 1]} : vector<20x640xf32> to vector<20x64xf32>
    %cst_61 = arith.constant dense<0.000000e+00> : vector<20x20xf32>
    %165 = tpu.matmul %162, %163, %cst_61 {dimension_numbers = #tpu.dot_dimension_numbers<[1], [1], [0], [0], [0, 0, 1, 0], [], []>} : vector<20x8xf32>, vector<20x8xf32>, vector<20x20xf32> -> vector<20x20xf32>
    %166 = arith.addf %165, %44 : vector<20x20xf32>
    %cst_62 = arith.constant dense<0xFF800000> : vector<20xf32>
    %167 = vector.multi_reduction <maximumf>, %166, %cst_62 [1] : vector<20x20xf32> to vector<20xf32>
    %168 = vector.shape_cast %167 : vector<20xf32> to vector<20x1xf32>
    %169 = vector.broadcast %168 : vector<20x1xf32> to vector<20x20xf32>
    %170 = arith.subf %166, %169 : vector<20x20xf32>
    %171 = math.exp %170 : vector<20x20xf32>
    %cst_63 = arith.constant dense<0.000000e+00> : vector<20xf32>
    %172 = vector.multi_reduction <add>, %171, %cst_63 [1] : vector<20x20xf32> to vector<20xf32>
    %173 = vector.shape_cast %172 : vector<20xf32> to vector<20x1xf32>
    %174 = vector.broadcast %173 : vector<20x1xf32> to vector<20x20xf32>
    %175 = arith.divf %171, %174 : vector<20x20xf32>
    %cst_64 = arith.constant dense<0.000000e+00> : vector<20x64xf32>
    %176 = tpu.matmul %175, %164, %cst_64 {dimension_numbers = #tpu.dot_dimension_numbers<[1], [0], [0], [1], [0, 0, 1, 1], [], []>} : vector<20x20xf32>, vector<20x64xf32>, vector<20x64xf32> -> vector<20x64xf32>
    %177 = arith.addf %161, %176 : vector<20x64xf32>
    %178 = vector.extract_strided_slice %96 {offsets = [0, 40], sizes = [20, 8], strides = [1, 1]} : vector<20x640xf32> to vector<20x8xf32>
    %179 = vector.extract_strided_slice %96 {offsets = [0, 104], sizes = [20, 8], strides = [1, 1]} : vector<20x640xf32> to vector<20x8xf32>
    %180 = vector.extract_strided_slice %96 {offsets = [0, 448], sizes = [20, 64], strides = [1, 1]} : vector<20x640xf32> to vector<20x64xf32>
    %cst_65 = arith.constant dense<0.000000e+00> : vector<20x20xf32>
    %181 = tpu.matmul %178, %179, %cst_65 {dimension_numbers = #tpu.dot_dimension_numbers<[1], [1], [0], [0], [0, 0, 1, 0], [], []>} : vector<20x8xf32>, vector<20x8xf32>, vector<20x20xf32> -> vector<20x20xf32>
    %182 = arith.addf %181, %44 : vector<20x20xf32>
    %cst_66 = arith.constant dense<0xFF800000> : vector<20xf32>
    %183 = vector.multi_reduction <maximumf>, %182, %cst_66 [1] : vector<20x20xf32> to vector<20xf32>
    %184 = vector.shape_cast %183 : vector<20xf32> to vector<20x1xf32>
    %185 = vector.broadcast %184 : vector<20x1xf32> to vector<20x20xf32>
    %186 = arith.subf %182, %185 : vector<20x20xf32>
    %187 = math.exp %186 : vector<20x20xf32>
    %cst_67 = arith.constant dense<0.000000e+00> : vector<20xf32>
    %188 = vector.multi_reduction <add>, %187, %cst_67 [1] : vector<20x20xf32> to vector<20xf32>
    %189 = vector.shape_cast %188 : vector<20xf32> to vector<20x1xf32>
    %190 = vector.broadcast %189 : vector<20x1xf32> to vector<20x20xf32>
    %191 = arith.divf %187, %190 : vector<20x20xf32>
    %cst_68 = arith.constant dense<0.000000e+00> : vector<20x64xf32>
    %192 = tpu.matmul %191, %180, %cst_68 {dimension_numbers = #tpu.dot_dimension_numbers<[1], [0], [0], [1], [0, 0, 1, 1], [], []>} : vector<20x20xf32>, vector<20x64xf32>, vector<20x64xf32> -> vector<20x64xf32>
    %193 = arith.addf %177, %192 : vector<20x64xf32>
    %194 = vector.extract_strided_slice %96 {offsets = [0, 48], sizes = [20, 8], strides = [1, 1]} : vector<20x640xf32> to vector<20x8xf32>
    %195 = vector.extract_strided_slice %96 {offsets = [0, 112], sizes = [20, 8], strides = [1, 1]} : vector<20x640xf32> to vector<20x8xf32>
    %196 = vector.extract_strided_slice %96 {offsets = [0, 512], sizes = [20, 64], strides = [1, 1]} : vector<20x640xf32> to vector<20x64xf32>
    %cst_69 = arith.constant dense<0.000000e+00> : vector<20x20xf32>
    %197 = tpu.matmul %194, %195, %cst_69 {dimension_numbers = #tpu.dot_dimension_numbers<[1], [1], [0], [0], [0, 0, 1, 0], [], []>} : vector<20x8xf32>, vector<20x8xf32>, vector<20x20xf32> -> vector<20x20xf32>
    %198 = arith.addf %197, %44 : vector<20x20xf32>
    %cst_70 = arith.constant dense<0xFF800000> : vector<20xf32>
    %199 = vector.multi_reduction <maximumf>, %198, %cst_70 [1] : vector<20x20xf32> to vector<20xf32>
    %200 = vector.shape_cast %199 : vector<20xf32> to vector<20x1xf32>
    %201 = vector.broadcast %200 : vector<20x1xf32> to vector<20x20xf32>
    %202 = arith.subf %198, %201 : vector<20x20xf32>
    %203 = math.exp %202 : vector<20x20xf32>
    %cst_71 = arith.constant dense<0.000000e+00> : vector<20xf32>
    %204 = vector.multi_reduction <add>, %203, %cst_71 [1] : vector<20x20xf32> to vector<20xf32>
    %205 = vector.shape_cast %204 : vector<20xf32> to vector<20x1xf32>
    %206 = vector.broadcast %205 : vector<20x1xf32> to vector<20x20xf32>
    %207 = arith.divf %203, %206 : vector<20x20xf32>
    %cst_72 = arith.constant dense<0.000000e+00> : vector<20x64xf32>
    %208 = tpu.matmul %207, %196, %cst_72 {dimension_numbers = #tpu.dot_dimension_numbers<[1], [0], [0], [1], [0, 0, 1, 1], [], []>} : vector<20x20xf32>, vector<20x64xf32>, vector<20x64xf32> -> vector<20x64xf32>
    %209 = arith.addf %193, %208 : vector<20x64xf32>
    %210 = vector.extract_strided_slice %96 {offsets = [0, 56], sizes = [20, 8], strides = [1, 1]} : vector<20x640xf32> to vector<20x8xf32>
    %211 = vector.extract_strided_slice %96 {offsets = [0, 120], sizes = [20, 8], strides = [1, 1]} : vector<20x640xf32> to vector<20x8xf32>
    %212 = vector.extract_strided_slice %96 {offsets = [0, 576], sizes = [20, 64], strides = [1, 1]} : vector<20x640xf32> to vector<20x64xf32>
    %cst_73 = arith.constant dense<0.000000e+00> : vector<20x20xf32>
    %213 = tpu.matmul %210, %211, %cst_73 {dimension_numbers = #tpu.dot_dimension_numbers<[1], [1], [0], [0], [0, 0, 1, 0], [], []>} : vector<20x8xf32>, vector<20x8xf32>, vector<20x20xf32> -> vector<20x20xf32>
    %214 = arith.addf %213, %44 : vector<20x20xf32>
    %cst_74 = arith.constant dense<0xFF800000> : vector<20xf32>
    %215 = vector.multi_reduction <maximumf>, %214, %cst_74 [1] : vector<20x20xf32> to vector<20xf32>
    %216 = vector.shape_cast %215 : vector<20xf32> to vector<20x1xf32>
    %217 = vector.broadcast %216 : vector<20x1xf32> to vector<20x20xf32>
    %218 = arith.subf %214, %217 : vector<20x20xf32>
    %219 = math.exp %218 : vector<20x20xf32>
    %cst_75 = arith.constant dense<0.000000e+00> : vector<20xf32>
    %220 = vector.multi_reduction <add>, %219, %cst_75 [1] : vector<20x20xf32> to vector<20xf32>
    %221 = vector.shape_cast %220 : vector<20xf32> to vector<20x1xf32>
    %222 = vector.broadcast %221 : vector<20x1xf32> to vector<20x20xf32>
    %223 = arith.divf %219, %222 : vector<20x20xf32>
    %cst_76 = arith.constant dense<0.000000e+00> : vector<20x64xf32>
    %224 = tpu.matmul %223, %212, %cst_76 {dimension_numbers = #tpu.dot_dimension_numbers<[1], [0], [0], [1], [0, 0, 1, 1], [], []>} : vector<20x20xf32>, vector<20x64xf32>, vector<20x64xf32> -> vector<20x64xf32>
    %225 = arith.addf %209, %224 : vector<20x64xf32>
    %cst_77 = arith.constant dense<0.000000e+00> : vector<2x64xf32>
    %226 = tpu.matmul %56, %225, %cst_77 {dimension_numbers = #tpu.dot_dimension_numbers<[1], [0], [0], [1], [0, 0, 1, 1], [], []>} : vector<2x20xf32>, vector<20x64xf32>, vector<2x64xf32> -> vector<2x64xf32>
    %c0_78 = arith.constant 0 : index
    %c0_79 = arith.constant 0 : index
    %227 = vector.load %arg7[%c0_78, %c0_79] : memref<64x10xf32, #tpu.memory_space<vmem>>, vector<64x10xf32>
    %cst_80 = arith.constant dense<0.000000e+00> : vector<2x10xf32>
    %228 = tpu.matmul %226, %227, %cst_80 {dimension_numbers = #tpu.dot_dimension_numbers<[1], [0], [0], [1], [0, 0, 1, 1], [], []>} : vector<2x64xf32>, vector<64x10xf32>, vector<2x10xf32> -> vector<2x10xf32>
    %c0_81 = arith.constant 0 : index
    %c0_82 = arith.constant 0 : index
    %229 = vector.load %arg8[%c0_81, %c0_82] : memref<1x10xf32, #tpu.memory_space<vmem>>, vector<1x10xf32>
    %230 = vector.broadcast %229 : vector<1x10xf32> to vector<2x10xf32>
    %231 = arith.addf %228, %230 : vector<2x10xf32>
    %c0_83 = arith.constant 0 : index
    %c0_84 = arith.constant 0 : index
    %232 = vector.load %arg9[%c0_83, %c0_84] : memref<2x10xf32, #tpu.memory_space<vmem>>, vector<2x10xf32>
    tpu.vector_store %arg9[%c0_83, %c0_84], %231 {strides = array<i32>} : memref<2x10xf32, #tpu.memory_space<vmem>>, vector<2x10xf32>,
    return
  }
}

</mosaic_0001>

<llo_original>
// kernel: squeeze.5
$region0: #{squeeze.5}
  %s0 = inlined_call_operand.vmem [shape: f32[64], index: 0, kind: input, shape index: {}]
  %s1 = inlined_call_operand.vmem [shape: f32[8,8], index: 1, kind: output, shape index: {}]
  $region1: #{squeeze.5} parent=0
    #allocation0 [shape = 'u8[4096]{0}', space=vmem, size = 0x1000, scoped, tag = 'scoped mem for input reshape']
    %s3 = ssub.s32 2, 1
    %v4 = vld [vmem:[%s0] sm:%s3]
    %5 = vst [vmem:[#allocation0] sm:%s3] %v4
    %v6 = vld [vmem:[#allocation0] sm:$0x1]
    %vm7 = vcmask 64512
    %8 = vst.msk [vmem:[%s1] sm:$0x1] %vm7, %v6
    %v9 = vld [vmem:[#allocation0] sm:$0x1]
    %10 = vrot.lane.b32.xlu0 %v9, 120
    %v11 = vpop.permute.xlu0 %10
    %vm12 = vcmask 64512
    %s13 = scalar_lea.vmem %s1, 1
    %14 = vst.msk [vmem:[%s13] sm:$0x1] %vm12, %v11
    %v15 = vld [vmem:[#allocation0] sm:$0x1]
    %16 = vrot.lane.b32.xlu0 %v15, 112
    %v17 = vpop.permute.xlu0 %16
    %vm18 = vcmask 64512
    %s19 = scalar_lea.vmem %s1, 2
    %20 = vst.msk [vmem:[%s19] sm:$0x1] %vm18, %v17
    %v21 = vld [vmem:[#allocation0] sm:$0x1]
    %22 = vrot.lane.b32.xlu0 %v21, 104
    %v23 = vpop.permute.xlu0 %22
    %vm24 = vcmask 64512
    %s25 = scalar_lea.vmem %s1, 3
    %26 = vst.msk [vmem:[%s25] sm:$0x1] %vm24, %v23
    %v27 = vld [vmem:[#allocation0] sm:$0x1]
    %28 = vrot.lane.b32.xlu0 %v27, 96
    %v29 = vpop.permute.xlu0 %28
    %vm30 = vcmask 64512
    %s31 = scalar_lea.vmem %s1, 4
    %32 = vst.msk [vmem:[%s31] sm:$0x1] %vm30, %v29
    %v33 = vld [vmem:[#allocation0] sm:$0x1]
    %34 = vrot.lane.b32.xlu0 %v33, 88
    %v35 = vpop.permute.xlu0 %34
    %vm36 = vcmask 64512
    %s37 = scalar_lea.vmem %s1, 5
    %38 = vst.msk [vmem:[%s37] sm:$0x1] %vm36, %v35
    %v39 = vld [vmem:[#allocation0] sm:$0x1]
    %40 = vrot.lane.b32.xlu0 %v39, 80
    %v41 = vpop.permute.xlu0 %40
    %vm42 = vcmask 64512
    %s43 = scalar_lea.vmem %s1, 6
    %44 = vst.msk [vmem:[%s43] sm:$0x1] %vm42, %v41
    %v45 = vld [vmem:[#allocation0] sm:$0x1]
    %46 = vrot.lane.b32.xlu0 %v45, 72
    %v47 = vpop.permute.xlu0 %46
    %vm48 = vcmask 64512
    %s49 = scalar_lea.vmem %s1, 7
    %50 = vst.msk [vmem:[%s49] sm:$0x1] %vm48, %v47

// kernel: pallas_forward.1
$region0: #{pallas_forward.1}
  #allocation0 [shape = 'u32[]', space=smem, size = 0x4, offset = 0x4, fixed_abs, tag = 'smem constant byte address 0x4 - core index']
  #allocation1 [shape = 'u32[72,128]{1,0:T(1,128)}', space=vmem, size = 0x9000, scoped, tag = 'internal scratch']
  #allocation2 [shape = 'f32[22,128]{1,0:T(8,128)}', space=vmem, size = 0x3000, scoped, tag = 'scratch operand']
  %s0 = inlined_call_operand.vmem [shape: f32[20,32], index: 0, kind: input, shape index: {}]
  %s1 = inlined_call_operand.vmem [shape: f32[96,128], index: 1, kind: input, shape index: {}]
  %s2 = inlined_call_operand.vmem [shape: f32[1,128], index: 2, kind: input, shape index: {}]
  %s3 = inlined_call_operand.vmem [shape: f32[384,64], index: 3, kind: input, shape index: {}]
  %s4 = inlined_call_operand.vmem [shape: f32[1,64], index: 4, kind: input, shape index: {}]
  %s5 = inlined_call_operand.vmem [shape: f32[64,640], index: 5, kind: input, shape index: {}]
  %s6 = inlined_call_operand.vmem [shape: f32[1,640], index: 6, kind: input, shape index: {}]
  %s7 = inlined_call_operand.vmem [shape: f32[64,10], index: 7, kind: input, shape index: {}]
  %s8 = inlined_call_operand.vmem [shape: f32[1,10], index: 8, kind: input, shape index: {}]
  %s9 = inlined_call_operand.hbm [shape: f32[2,10], index: 9, kind: output, shape index: {}]
  %s10 = sld [smem:[#allocation0]]
  $region46: #{pallas_forward.1} parent=0
    _
  %s12 = ssub.s32 1, %s10
  %s13 = scalar_select 0, %s12, %s10
  $region1: #{pallas_forward.1} parent=0
    #allocation3 [shape = 'u8[1024]{0}', space=vmem, size = 0x400, scoped, tag = 'output window, operand 0, single buffered']
    #allocation4 [shape = 's32[1]{0}', space=sflag, size = 0x4, scoped, tag = 'scoped memory for pallas_forward.1']
    %14 = vsyncpa [#allocation4], 0
    // Predicated region
    $region2: #{pallas_forward.1} parent=1 // pred_check
      _
    $region3: #{pallas_forward.1} parent=1 // pred_check_branch
      %16 = sbr.rel (0) target = $region5
    $region4: #{pallas_forward.1} parent=1 // pred_region
      _
    $region5: #{pallas_forward.1} parent=1 // pred_fallthru
      _
    // Predicated region
    $region6: #{pallas_forward.1} parent=1 // pred_check
      _
    $region7: #{pallas_forward.1} parent=1 // pred_check_branch
      %18 = sbr.rel (0) target = $region9
    $region8: #{pallas_forward.1} parent=1 // pred_region
      _
    $region9: #{pallas_forward.1} parent=1 // pred_fallthru
      _
    // Predicated region
    $region10: #{pallas_forward.1} parent=1 // pred_check
      _
    $region11: #{pallas_forward.1} parent=1 // pred_check_branch
      %20 = sbr.rel (0) target = $region13
    $region12: #{pallas_forward.1} parent=1 // pred_region
      _
    $region13: #{pallas_forward.1} parent=1 // pred_fallthru
      _
    // Predicated region
    $region14: #{pallas_forward.1} parent=1 // pred_check
      _
    $region15: #{pallas_forward.1} parent=1 // pred_check_branch
      %22 = sbr.rel (0) target = $region17
    $region16: #{pallas_forward.1} parent=1 // pred_region
      _
    $region17: #{pallas_forward.1} parent=1 // pred_fallthru
      _
    // Predicated region
    $region18: #{pallas_forward.1} parent=1 // pred_check
      _
    $region19: #{pallas_forward.1} parent=1 // pred_check_branch
      %24 = sbr.rel (0) target = $region21
    $region20: #{pallas_forward.1} parent=1 // pred_region
      _
    $region21: #{pallas_forward.1} parent=1 // pred_fallthru
      _
    // Predicated region
    $region22: #{pallas_forward.1} parent=1 // pred_check
      _
    $region23: #{pallas_forward.1} parent=1 // pred_check_branch
      %26 = sbr.rel (0) target = $region25
    $region24: #{pallas_forward.1} parent=1 // pred_region
      _
    $region25: #{pallas_forward.1} parent=1 // pred_fallthru
      _
    // Predicated region
    $region26: #{pallas_forward.1} parent=1 // pred_check
      _
    $region27: #{pallas_forward.1} parent=1 // pred_check_branch
      %28 = sbr.rel (0) target = $region29
    $region28: #{pallas_forward.1} parent=1 // pred_region
      _
    $region29: #{pallas_forward.1} parent=1 // pred_fallthru
      _
    // Predicated region
    $region30: #{pallas_forward.1} parent=1 // pred_check
      _
    $region31: #{pallas_forward.1} parent=1 // pred_check_branch
      %30 = sbr.rel (0) target = $region33
    $region32: #{pallas_forward.1} parent=1 // pred_region
      _
    $region33: #{pallas_forward.1} parent=1 // pred_fallthru
      _
    // Predicated region
    $region34: #{pallas_forward.1} parent=1 // pred_check
      _
    $region35: #{pallas_forward.1} parent=1 // pred_check_branch
      %32 = sbr.rel (0) target = $region37
    $region36: #{pallas_forward.1} parent=1 // pred_region
      _
    $region37: #{pallas_forward.1} parent=1 // pred_fallthru
      _
    %v33 = vlaneseq
    %v34 = vshrl.u32 %v33, 7
    %v35 = vadd.s32 %v34, 8
    %v36 = vadd.s32 %v34, 16
    %v37 = vlaneseq
    %v38 = vand.u32 %v37, 127
    %vm39 = vcmp.ge.s32.totalorder %v34, 5
    %vm40 = vcmp.ge.s32.totalorder %v35, 5
    %vm41 = vcmp.ge.s32.totalorder %v36, 5
    %v42 = vsel %vm39, 1, 0
    %v43 = vsel %vm40, 1, 0
    %v44 = vsel %vm41, 1, 0
    %vm45 = vcmp.ge.s32.totalorder %v38, 5
    %v46 = vsel %vm45, 1, 0
    %vm47 = vcmp.ge.s32.totalorder %v34, 10
    %vm48 = vcmp.ge.s32.totalorder %v35, 10
    %vm49 = vcmp.ge.s32.totalorder %v36, 10
    %v50 = vsel %vm47, 1, 0
    %v51 = vsel %vm48, 1, 0
    %v52 = vsel %vm49, 1, 0
    %v53 = vadd.s32 %v42, %v50
    %v54 = vadd.s32 %v43, %v51
    %v55 = vadd.s32 %v44, %v52
    %vm56 = vcmp.ge.s32.totalorder %v38, 10
    %v57 = vsel %vm56, 1, 0
    %v58 = vadd.s32 %v46, %v57
    %vm59 = vcmp.ge.s32.totalorder %v34, 15
    %vm60 = vcmp.ge.s32.totalorder %v35, 15
    %vm61 = vcmp.ge.s32.totalorder %v36, 15
    %v62 = vsel %vm59, 1, 0
    %v63 = vsel %vm60, 1, 0
    %v64 = vsel %vm61, 1, 0
    %v65 = vadd.s32 %v53, %v62
    %v66 = vadd.s32 %v54, %v63
    %v67 = vadd.s32 %v55, %v64
    %vm68 = vcmp.ge.s32.totalorder %v38, 15
    %v69 = vsel %vm68, 1, 0
    %v70 = vadd.s32 %v58, %v69
    %v71 = vmul.u32 %v65, 5
    %v72 = vmul.u32 %v66, 5
    %v73 = vmul.u32 %v67, 5
    %v74 = vsub.s32 %v34, %v71
    %v75 = vsub.s32 %v35, %v72
    %v76 = vsub.s32 %v36, %v73
    %vm77 = vcmp.ne.s32.totalorder %v74, 0
    %vm78 = vcmp.ne.s32.totalorder %v75, 0
    %vm79 = vcmp.ne.s32.totalorder %v76, 0
    %v80 = vsel %vm77, 1, 0
    %v81 = vsel %vm78, 1, 0
    %v82 = vsel %vm79, 1, 0
    %v83 = vcvt.s32.f32 %v80
    %v84 = vcvt.s32.f32 %v81
    %v85 = vcvt.s32.f32 %v82
    %vm86 = vcmp.ne.s32.totalorder %v74, 4
    %vm87 = vcmp.ne.s32.totalorder %v75, 4
    %vm88 = vcmp.ne.s32.totalorder %v76, 4
    %v89 = vsel %vm86, 1, 0
    %v90 = vsel %vm87, 1, 0
    %v91 = vsel %vm88, 1, 0
    %v92 = vcvt.s32.f32 %v89
    %v93 = vcvt.s32.f32 %v90
    %v94 = vcvt.s32.f32 %v91
    %vm95 = vcmp.eq.s32.totalorder %v65, %v70
    %vm96 = vcmp.eq.s32.totalorder %v66, %v70
    %vm97 = vcmp.eq.s32.totalorder %v67, %v70
    %v98 = vsel %vm95, 0.0, -1e+09
    %v99 = vsel %vm96, 0.0, -1e+09
    %v100 = vsel %vm97, 0.0, -1e+09
    %vm101 = vcmp.eq.s32.totalorder %v34, %v57
    %v102 = vsel %vm101, 0.1, 0.0
    %103 = vst [vmem:[#allocation2] sm:$0x1] 0.0
    %104 = vst [vmem:[#allocation2 + $0x15] sm:$0x1] 0.0
    %v105 = vld [vmem:[%s0] sm:$0xff]
    %v106 = vld [vmem:[%s0 + $0x8] sm:$0xff]
    %v107 = vld [vmem:[%s0 + $0x10] sm:$0xf]
    %vm108 = vcmask 261120
    %109 = vst.msk [vmem:[#allocation2 + $0x1] sm:$0xff] %vm108, %v105
    %110 = vst.msk [vmem:[#allocation2 + $0x9] sm:$0xff] %vm108, %v106
    %vm111 = vcmask 257024
    %112 = vst.msk [vmem:[#allocation2 + $0x11] sm:$0xf] %vm111, %v107
    %v113 = vld [vmem:[#allocation2] sm:$0xff]
    %v114 = vld [vmem:[#allocation2 + $0x8] sm:$0xff]
    %v115 = vld [vmem:[#allocation2 + $0x10] sm:$0xf]
    %v116 = vmul.f32 %v113, %v83
    %v117 = vmul.f32 %v114, %v84
    %v118 = vmul.f32 %v115, %v85
    %v119 = vld [vmem:[#allocation2 + $0x2] sm:$0xff]
    %v120 = vld [vmem:[#allocation2 + $0xa] sm:$0xff]
    %v121 = vld [vmem:[#allocation2 + $0x12] sm:$0xf]
    %v122 = vmul.f32 %v119, %v92
    %v123 = vmul.f32 %v120, %v93
    %v124 = vmul.f32 %v121, %v94
    %128 = vrot.lane.b32.xlu0 %v105, 32
    %v129 = vpop.permute.xlu0 %128
    %130 = vrot.lane.b32.xlu0 %v106, 32
    %v131 = vpop.permute.xlu0 %130
    %132 = vrot.lane.b32.xlu0 %v107, 32
    %v133 = vpop.permute.xlu0 %132
    %140 = vrot.lane.b32.xlu0 %v122, 64
    %v141 = vpop.permute.xlu0 %140
    %142 = vrot.lane.b32.xlu0 %v123, 64
    %v143 = vpop.permute.xlu0 %142
    %144 = vrot.lane.b32.xlu0 %v124, 64
    %v145 = vpop.permute.xlu0 %144
    %v149 = vsel %vm108, %v116, %v129
    %v150 = vsel %vm108, %v117, %v131
    %v151 = vsel %vm108, %v118, %v133
    %vm152 = vcmask 523264
    %v153 = vsel %vm152, %v149, %v141
    %v154 = vsel %vm152, %v150, %v143
    %v155 = vsel %vm152, %v151, %v145
    %v156 = vld [vmem:[%s1] sm:$0xff]
    %v157 = vld [vmem:[%s1 + $0x8] sm:$0xff]
    %v158 = vld [vmem:[%s1 + $0x10] sm:$0xff]
    %v159 = vld [vmem:[%s1 + $0x18] sm:$0xff]
    %v160 = vld [vmem:[%s1 + $0x20] sm:$0xff]
    %v161 = vld [vmem:[%s1 + $0x28] sm:$0xff]
    %v162 = vld [vmem:[%s1 + $0x30] sm:$0xff]
    %v163 = vld [vmem:[%s1 + $0x38] sm:$0xff]
    %v164 = vld [vmem:[%s1 + $0x40] sm:$0xff]
    %v165 = vld [vmem:[%s1 + $0x48] sm:$0xff]
    %v166 = vld [vmem:[%s1 + $0x50] sm:$0xff]
    %v167 = vld [vmem:[%s1 + $0x58] sm:$0xff]
    %v168 = vld [vmem:[%s2] sm:$0x1]
    %v170 = vperm.slane %v168, 0
    %vm172 = vcmask 785408
    %v174 = vsel %vm172, %v153, 0
    %v177 = vsel %vm172, %v154, 0
    %v180 = vsel %vm172, %v155, 0
    %182 = vmatpush.msra.mxu0 0.0
    %183 = vmatpush.msra.mxu0 0.0
    %184 = vmatpush.msra.mxu0 0.0
    %185 = vmatpush.msra.mxu0 0.0
    %186 = vmatpush.msra.mxu0 %v167
    %187 = vmatpush.msra.mxu0 %v166
    %188 = vmatpush.msra.mxu0 %v165
    %189 = vmatpush.msra.mxu0 %v164
    %190 = vmatpush.msra.mxu0 %v163
    %191 = vmatpush.msra.mxu0 %v162
    %192 = vmatpush.msra.mxu0 %v161
    %193 = vmatpush.msra.mxu0 %v160
    %194 = vmatpush.msra.mxu0 %v159
    %195 = vmatpush.msra.mxu0 %v158
    %196 = vmatpush.msra.mxu0 %v157
    %197 = vmatpush.msra.mxu0 %v156
    %198 = vmatmul.f32.gmra.mxu0 %v174
    %v199 = vpop.f32.mrf.mxu0
    %v200 = vadd.f32 %v170, %v199
    %201 = vmatmul.f32.gmra.mxu0 %v177
    %v202 = vpop.f32.mrf.mxu0
    %v203 = vadd.f32 %v170, %v202
    %204 = vmatmul.f32.gmra.mxu0 %v180
    %v205 = vpop.f32.mrf.mxu0
    %v206 = vadd.f32 %v170, %v205
    %207 = vdwg.mxu0
    %v208 = vmax.f32 %v200, 0.0
    %v209 = vmax.f32 %v203, 0.0
    %v210 = vmax.f32 %v206, 0.0
    %211 = vst [vmem:[#allocation2 + $0x1] sm:$0xff] %v208
    %212 = vst [vmem:[#allocation2 + $0x9] sm:$0xff] %v209
    %213 = vst [vmem:[#allocation2 + $0x11] sm:$0xf] %v210
    %v214 = vld [vmem:[#allocation2] sm:$0xff]
    %v215 = vld [vmem:[#allocation2 + $0x8] sm:$0xff]
    %v216 = vld [vmem:[#allocation2 + $0x10] sm:$0xf]
    %v217 = vmul.f32 %v214, %v83
    %v218 = vmul.f32 %v215, %v84
    %v219 = vmul.f32 %v216, %v85
    %v220 = vld [vmem:[#allocation2 + $0x2] sm:$0xff]
    %v221 = vld [vmem:[#allocation2 + $0xa] sm:$0xff]
    %v222 = vld [vmem:[#allocation2 + $0x12] sm:$0xf]
    %v223 = vmul.f32 %v220, %v92
    %v224 = vmul.f32 %v221, %v93
    %v225 = vmul.f32 %v222, %v94
    %v226 = vld [vmem:[%s3] sm:$0xff]
    %v227 = vld [vmem:[%s3 + $0x8] sm:$0xff]
    %v228 = vld [vmem:[%s3 + $0x10] sm:$0xff]
    %v229 = vld [vmem:[%s3 + $0x18] sm:$0xff]
    %v230 = vld [vmem:[%s3 + $0x20] sm:$0xff]
    %v231 = vld [vmem:[%s3 + $0x28] sm:$0xff]
    %v232 = vld [vmem:[%s3 + $0x30] sm:$0xff]
    %v233 = vld [vmem:[%s3 + $0x38] sm:$0xff]
    %v234 = vld [vmem:[%s3 + $0x40] sm:$0xff]
    %v235 = vld [vmem:[%s3 + $0x48] sm:$0xff]
    %v236 = vld [vmem:[%s3 + $0x50] sm:$0xff]
    %v237 = vld [vmem:[%s3 + $0x58] sm:$0xff]
    %v238 = vld [vmem:[%s3 + $0x60] sm:$0xff]
    %v239 = vld [vmem:[%s3 + $0x68] sm:$0xff]
    %v240 = vld [vmem:[%s3 + $0x70] sm:$0xff]
    %v241 = vld [vmem:[%s3 + $0x78] sm:$0xff]
    %v242 = vld [vmem:[%s3 + $0x80] sm:$0xff]
    %v243 = vld [vmem:[%s3 + $0x88] sm:$0xff]
    %v244 = vld [vmem:[%s3 + $0x90] sm:$0xff]
    %v245 = vld [vmem:[%s3 + $0x98] sm:$0xff]
    %v246 = vld [vmem:[%s3 + $0xa0] sm:$0xff]
    %v247 = vld [vmem:[%s3 + $0xa8] sm:$0xff]
    %v248 = vld [vmem:[%s3 + $0xb0] sm:$0xff]
    %v249 = vld [vmem:[%s3 + $0xb8] sm:$0xff]
    %v250 = vld [vmem:[%s3 + $0xc0] sm:$0xff]
    %v251 = vld [vmem:[%s3 + $0xc8] sm:$0xff]
    %v252 = vld [vmem:[%s3 + $0xd0] sm:$0xff]
    %v253 = vld [vmem:[%s3 + $0xd8] sm:$0xff]
    %v254 = vld [vmem:[%s3 + $0xe0] sm:$0xff]
    %v255 = vld [vmem:[%s3 + $0xe8] sm:$0xff]
    %v256 = vld [vmem:[%s3 + $0xf0] sm:$0xff]
    %v257 = vld [vmem:[%s3 + $0xf8] sm:$0xff]
    %v258 = vld [vmem:[%s3 + $0x100] sm:$0xff]
    %v259 = vld [vmem:[%s3 + $0x108] sm:$0xff]
    %v260 = vld [vmem:[%s3 + $0x110] sm:$0xff]
    %v261 = vld [vmem:[%s3 + $0x118] sm:$0xff]
    %v262 = vld [vmem:[%s3 + $0x120] sm:$0xff]
    %v263 = vld [vmem:[%s3 + $0x128] sm:$0xff]
    %v264 = vld [vmem:[%s3 + $0x130] sm:$0xff]
    %v265 = vld [vmem:[%s3 + $0x138] sm:$0xff]
    %v266 = vld [vmem:[%s3 + $0x140] sm:$0xff]
    %v267 = vld [vmem:[%s3 + $0x148] sm:$0xff]
    %v268 = vld [vmem:[%s3 + $0x150] sm:$0xff]
    %v269 = vld [vmem:[%s3 + $0x158] sm:$0xff]
    %v270 = vld [vmem:[%s3 + $0x160] sm:$0xff]
    %v271 = vld [vmem:[%s3 + $0x168] sm:$0xff]
    %v272 = vld [vmem:[%s3 + $0x170] sm:$0xff]
    %v273 = vld [vmem:[%s3 + $0x178] sm:$0xff]
    %v274 = vld [vmem:[%s4] sm:$0x1]
    %v276 = vperm.slane %v274, 0
    %278 = vmatpush.msra.mxu0 %v241
    %279 = vmatpush.msra.mxu0 %v240
    %280 = vmatpush.msra.mxu0 %v239
    %281 = vmatpush.msra.mxu0 %v238
    %282 = vmatpush.msra.mxu0 %v237
    %283 = vmatpush.msra.mxu0 %v236
    %284 = vmatpush.msra.mxu0 %v235
    %285 = vmatpush.msra.mxu0 %v234
    %286 = vmatpush.msra.mxu0 %v233
    %287 = vmatpush.msra.mxu0 %v232
    %288 = vmatpush.msra.mxu0 %v231
    %289 = vmatpush.msra.mxu0 %v230
    %290 = vmatpush.msra.mxu0 %v229
    %291 = vmatpush.msra.mxu0 %v228
    %292 = vmatpush.msra.mxu0 %v227
    %293 = vmatpush.msra.mxu0 %v226
    %294 = vmatmul.f32.gmra.mxu0 %v217
    %v295 = vpop.f32.mrf.mxu0
    %v296 = vadd.f32 %v276, %v295
    %297 = vmatmul.f32.gmra.mxu0 %v218
    %v298 = vpop.f32.mrf.mxu0
    %v299 = vadd.f32 %v276, %v298
    %300 = vmatmul.f32.gmra.mxu0 %v219
    %v301 = vpop.f32.mrf.mxu0
    %v302 = vadd.f32 %v276, %v301
    %303 = vdwg.mxu0
    %304 = vmatpush.msra.mxu0 %v257
    %305 = vmatpush.msra.mxu0 %v256
    %306 = vmatpush.msra.mxu0 %v255
    %307 = vmatpush.msra.mxu0 %v254
    %308 = vmatpush.msra.mxu0 %v253
    %309 = vmatpush.msra.mxu0 %v252
    %310 = vmatpush.msra.mxu0 %v251
    %311 = vmatpush.msra.mxu0 %v250
    %312 = vmatpush.msra.mxu0 %v249
    %313 = vmatpush.msra.mxu0 %v248
    %314 = vmatpush.msra.mxu0 %v247
    %315 = vmatpush.msra.mxu0 %v246
    %316 = vmatpush.msra.mxu0 %v245
    %317 = vmatpush.msra.mxu0 %v244
    %318 = vmatpush.msra.mxu0 %v243
    %319 = vmatpush.msra.mxu0 %v242
    %320 = vmatmul.f32.gmra.mxu0 %v208
    %v321 = vpop.f32.mrf.mxu0
    %v322 = vadd.f32 %v296, %v321
    %323 = vmatmul.f32.gmra.mxu0 %v209
    %v324 = vpop.f32.mrf.mxu0
    %v325 = vadd.f32 %v299, %v324
    %326 = vmatmul.f32.gmra.mxu0 %v210
    %v327 = vpop.f32.mrf.mxu0
    %v328 = vadd.f32 %v302, %v327
    %329 = vdwg.mxu0
    %330 = vmatpush.msra.mxu0 %v273
    %331 = vmatpush.msra.mxu0 %v272
    %332 = vmatpush.msra.mxu0 %v271
    %333 = vmatpush.msra.mxu0 %v270
    %334 = vmatpush.msra.mxu0 %v269
    %335 = vmatpush.msra.mxu0 %v268
    %336 = vmatpush.msra.mxu0 %v267
    %337 = vmatpush.msra.mxu0 %v266
    %338 = vmatpush.msra.mxu0 %v265
    %339 = vmatpush.msra.mxu0 %v264
    %340 = vmatpush.msra.mxu0 %v263
    %341 = vmatpush.msra.mxu0 %v262
    %342 = vmatpush.msra.mxu0 %v261
    %343 = vmatpush.msra.mxu0 %v260
    %344 = vmatpush.msra.mxu0 %v259
    %345 = vmatpush.msra.mxu0 %v258
    %346 = vmatmul.f32.gmra.mxu0 %v223
    %v347 = vpop.f32.mrf.mxu0
    %v348 = vadd.f32 %v322, %v347
    %349 = vmatmul.f32.gmra.mxu0 %v224
    %v350 = vpop.f32.mrf.mxu0
    %v351 = vadd.f32 %v325, %v350
    %352 = vmatmul.f32.gmra.mxu0 %v225
    %v353 = vpop.f32.mrf.mxu0
    %v354 = vadd.f32 %v328, %v353
    %355 = vdwg.mxu0
    %v356 = vmax.f32 %v348, 0.0
    %v357 = vmax.f32 %v351, 0.0
    %v358 = vmax.f32 %v354, 0.0
    %v359 = vld [vmem:[%s5] sm:$0xff]
    %v360 = vld [vmem:[%s5 + $0x8] sm:$0xff]
    %v361 = vld [vmem:[%s5 + $0x10] sm:$0xff]
    %v362 = vld [vmem:[%s5 + $0x18] sm:$0xff]
    %v363 = vld [vmem:[%s5 + $0x20] sm:$0xff]
    %v364 = vld [vmem:[%s5 + $0x28] sm:$0xff]
    %v365 = vld [vmem:[%s5 + $0x30] sm:$0xff]
    %v366 = vld [vmem:[%s5 + $0x38] sm:$0xff]
    %v367 = vld [vmem:[%s5 + $0x40] sm:$0xff]
    %v368 = vld [vmem:[%s5 + $0x48] sm:$0xff]
    %v369 = vld [vmem:[%s5 + $0x50] sm:$0xff]
    %v370 = vld [vmem:[%s5 + $0x58] sm:$0xff]
    %v371 = vld [vmem:[%s5 + $0x60] sm:$0xff]
    %v372 = vld [vmem:[%s5 + $0x68] sm:$0xff]
    %v373 = vld [vmem:[%s5 + $0x70] sm:$0xff]
    %v374 = vld [vmem:[%s5 + $0x78] sm:$0xff]
    %v375 = vld [vmem:[%s5 + $0x80] sm:$0xff]
    %v376 = vld [vmem:[%s5 + $0x88] sm:$0xff]
    %v377 = vld [vmem:[%s5 + $0x90] sm:$0xff]
    %v378 = vld [vmem:[%s5 + $0x98] sm:$0xff]
    %v379 = vld [vmem:[%s5 + $0xa0] sm:$0xff]
    %v380 = vld [vmem:[%s5 + $0xa8] sm:$0xff]
    %v381 = vld [vmem:[%s5 + $0xb0] sm:$0xff]
    %v382 = vld [vmem:[%s5 + $0xb8] sm:$0xff]
    %v383 = vld [vmem:[%s5 + $0xc0] sm:$0xff]
    %v384 = vld [vmem:[%s5 + $0xc8] sm:$0xff]
    %v385 = vld [vmem:[%s5 + $0xd0] sm:$0xff]
    %v386 = vld [vmem:[%s5 + $0xd8] sm:$0xff]
    %v387 = vld [vmem:[%s5 + $0xe0] sm:$0xff]
    %v388 = vld [vmem:[%s5 + $0xe8] sm:$0xff]
    %v389 = vld [vmem:[%s5 + $0xf0] sm:$0xff]
    %v390 = vld [vmem:[%s5 + $0xf8] sm:$0xff]
    %v391 = vld [vmem:[%s5 + $0x100] sm:$0xff]
    %v392 = vld [vmem:[%s5 + $0x108] sm:$0xff]
    %v393 = vld [vmem:[%s5 + $0x110] sm:$0xff]
    %v394 = vld [vmem:[%s5 + $0x118] sm:$0xff]
    %v395 = vld [vmem:[%s5 + $0x120] sm:$0xff]
    %v396 = vld [vmem:[%s5 + $0x128] sm:$0xff]
    %v397 = vld [vmem:[%s5 + $0x130] sm:$0xff]
    %v398 = vld [vmem:[%s5 + $0x138] sm:$0xff]
    %v399 = vld [vmem:[%s6] sm:$0x1f]
    %v401 = vperm.slane %v399, 0
    %v402 = vperm.slane %v399, 1
    %v403 = vperm.slane %v399, 2
    %v404 = vperm.slane %v399, 3
    %v405 = vperm.slane %v399, 4
    %v412 = vsel %vm152, %v356, 0
    %v415 = vsel %vm152, %v357, 0
    %v418 = vsel %vm152, %v358, 0
    %420 = vmatpush.msra.mxu0 0.0
    %421 = vmatpush.msra.mxu0 0.0
    %422 = vmatpush.msra.mxu0 0.0
    %423 = vmatpush.msra.mxu0 0.0
    %424 = vmatpush.msra.mxu0 0.0
    %425 = vmatpush.msra.mxu0 0.0
    %426 = vmatpush.msra.mxu0 0.0
    %427 = vmatpush.msra.mxu0 0.0
    %428 = vmatpush.msra.mxu0 %v394
    %429 = vmatpush.msra.mxu0 %v389
    %430 = vmatpush.msra.mxu0 %v384
    %431 = vmatpush.msra.mxu0 %v379
    %432 = vmatpush.msra.mxu0 %v374
    %433 = vmatpush.msra.mxu0 %v369
    %434 = vmatpush.msra.mxu0 %v364
    %435 = vmatpush.msra.mxu0 %v359
    %436 = vmatmul.f32.gmra.mxu0 %v412
    %v437 = vpop.f32.mrf.mxu0
    %v438 = vadd.f32 %v401, %v437
    %439 = vmatmul.f32.gmra.mxu0 %v415
    %v440 = vpop.f32.mrf.mxu0
    %v441 = vadd.f32 %v401, %v440
    %442 = vmatmul.f32.gmra.mxu0 %v418
    %v443 = vpop.f32.mrf.mxu0
    %v444 = vadd.f32 %v401, %v443
    %445 = vdwg.mxu0
    %446 = vmatpush.msra.mxu0 0.0
    %447 = vmatpush.msra.mxu0 0.0
    %448 = vmatpush.msra.mxu0 0.0
    %449 = vmatpush.msra.mxu0 0.0
    %450 = vmatpush.msra.mxu0 0.0
    %451 = vmatpush.msra.mxu0 0.0
    %452 = vmatpush.msra.mxu0 0.0
    %453 = vmatpush.msra.mxu0 0.0
    %454 = vmatpush.msra.mxu0 %v395
    %455 = vmatpush.msra.mxu0 %v390
    %456 = vmatpush.msra.mxu0 %v385
    %457 = vmatpush.msra.mxu0 %v380
    %458 = vmatpush.msra.mxu0 %v375
    %459 = vmatpush.msra.mxu0 %v370
    %460 = vmatpush.msra.mxu0 %v365
    %461 = vmatpush.msra.mxu0 %v360
    %462 = vmatmul.f32.gmra.mxu0 %v412
    %v463 = vpop.f32.mrf.mxu0
    %v464 = vadd.f32 %v402, %v463
    %465 = vmatmul.f32.gmra.mxu0 %v415
    %v466 = vpop.f32.mrf.mxu0
    %v467 = vadd.f32 %v402, %v466
    %468 = vmatmul.f32.gmra.mxu0 %v418
    %v469 = vpop.f32.mrf.mxu0
    %v470 = vadd.f32 %v402, %v469
    %471 = vdwg.mxu0
    %472 = vmatpush.msra.mxu0 0.0
    %473 = vmatpush.msra.mxu0 0.0
    %474 = vmatpush.msra.mxu0 0.0
    %475 = vmatpush.msra.mxu0 0.0
    %476 = vmatpush.msra.mxu0 0.0
    %477 = vmatpush.msra.mxu0 0.0
    %478 = vmatpush.msra.mxu0 0.0
    %479 = vmatpush.msra.mxu0 0.0
    %480 = vmatpush.msra.mxu0 %v396
    %481 = vmatpush.msra.mxu0 %v391
    %482 = vmatpush.msra.mxu0 %v386
    %483 = vmatpush.msra.mxu0 %v381
    %484 = vmatpush.msra.mxu0 %v376
    %485 = vmatpush.msra.mxu0 %v371
    %486 = vmatpush.msra.mxu0 %v366
    %487 = vmatpush.msra.mxu0 %v361
    %488 = vmatmul.f32.gmra.mxu0 %v412
    %v489 = vpop.f32.mrf.mxu0
    %v490 = vadd.f32 %v403, %v489
    %491 = vmatmul.f32.gmra.mxu0 %v415
    %v492 = vpop.f32.mrf.mxu0
    %v493 = vadd.f32 %v403, %v492
    %494 = vmatmul.f32.gmra.mxu0 %v418
    %v495 = vpop.f32.mrf.mxu0
    %v496 = vadd.f32 %v403, %v495
    %497 = vdwg.mxu0
    %498 = vmatpush.msra.mxu0 0.0
    %499 = vmatpush.msra.mxu0 0.0
    %500 = vmatpush.msra.mxu0 0.0
    %501 = vmatpush.msra.mxu0 0.0
    %502 = vmatpush.msra.mxu0 0.0
    %503 = vmatpush.msra.mxu0 0.0
    %504 = vmatpush.msra.mxu0 0.0
    %505 = vmatpush.msra.mxu0 0.0
    %506 = vmatpush.msra.mxu0 %v397
    %507 = vmatpush.msra.mxu0 %v392
    %508 = vmatpush.msra.mxu0 %v387
    %509 = vmatpush.msra.mxu0 %v382
    %510 = vmatpush.msra.mxu0 %v377
    %511 = vmatpush.msra.mxu0 %v372
    %512 = vmatpush.msra.mxu0 %v367
    %513 = vmatpush.msra.mxu0 %v362
    %514 = vmatmul.f32.gmra.mxu0 %v412
    %v515 = vpop.f32.mrf.mxu0
    %v516 = vadd.f32 %v404, %v515
    %517 = vmatmul.f32.gmra.mxu0 %v415
    %v518 = vpop.f32.mrf.mxu0
    %v519 = vadd.f32 %v404, %v518
    %520 = vmatmul.f32.gmra.mxu0 %v418
    %v521 = vpop.f32.mrf.mxu0
    %v522 = vadd.f32 %v404, %v521
    %523 = vdwg.mxu0
    %524 = vmatpush.msra.mxu0 0.0
    %525 = vmatpush.msra.mxu0 0.0
    %526 = vmatpush.msra.mxu0 0.0
    %527 = vmatpush.msra.mxu0 0.0
    %528 = vmatpush.msra.mxu0 0.0
    %529 = vmatpush.msra.mxu0 0.0
    %530 = vmatpush.msra.mxu0 0.0
    %531 = vmatpush.msra.mxu0 0.0
    %532 = vmatpush.msra.mxu0 %v398
    %533 = vmatpush.msra.mxu0 %v393
    %534 = vmatpush.msra.mxu0 %v388
    %535 = vmatpush.msra.mxu0 %v383
    %536 = vmatpush.msra.mxu0 %v378
    %537 = vmatpush.msra.mxu0 %v373
    %538 = vmatpush.msra.mxu0 %v368
    %539 = vmatpush.msra.mxu0 %v363
    %540 = vmatmul.f32.gmra.mxu0 %v412
    %v541 = vpop.f32.mrf.mxu0
    %v542 = vadd.f32 %v405, %v541
    %543 = vmatmul.f32.gmra.mxu0 %v415
    %v544 = vpop.f32.mrf.mxu0
    %v545 = vadd.f32 %v405, %v544
    %546 = vmatmul.f32.gmra.mxu0 %v418
    %v547 = vpop.f32.mrf.mxu0
    %v548 = vadd.f32 %v405, %v547
    %549 = vdwg.mxu0
    %553 = vrot.lane.b32.xlu0 %v438, 64
    %v554 = vpop.permute.xlu0 %553
    %555 = vrot.lane.b32.xlu0 %v441, 64
    %v556 = vpop.permute.xlu0 %555
    %557 = vrot.lane.b32.xlu0 %v444, 64
    %v558 = vpop.permute.xlu0 %557
    %vm559 = vcmask 64512
    %v560 = vsel %vm559, %v438, 0
    %v562 = vsel %vm559, %v441, 0
    %v564 = vsel %vm559, %v444, 0
    %v566 = vsel %vm559, %v554, 0
    %v568 = vsel %vm559, %v556, 0
    %v570 = vsel %vm559, %v558, 0
    %572 = vmatpush.xpose.msra.mxu0 0.0
    %573 = vmatpush.xpose.msra.mxu0 0.0
    %574 = vmatpush.xpose.msra.mxu0 0.0
    %575 = vmatpush.xpose.msra.mxu0 0.0
    %576 = vmatpush.xpose.msra.mxu0 0.0
    %577 = vmatpush.xpose.msra.mxu0 0.0
    %578 = vmatpush.xpose.msra.mxu0 0.0
    %579 = vmatpush.xpose.msra.mxu0 0.0
    %580 = vmatpush.xpose.msra.mxu0 0.0
    %581 = vmatpush.xpose.msra.mxu0 0.0
    %582 = vmatpush.xpose.msra.mxu0 0.0
    %583 = vmatpush.xpose.msra.mxu0 0.0
    %584 = vmatpush.xpose.msra.mxu0 0.0
    %585 = vmatpush.xpose.msra.mxu0 %v570
    %586 = vmatpush.xpose.msra.mxu0 %v568
    %587 = vmatpush.xpose.msra.mxu0 %v566
    %588 = vmatmul.f32.gmra.mxu0 %v560
    %v589 = vpop.f32.mrf.mxu0
    %v590 = vadd.f32 %v98, %v589
    %591 = vmatmul.f32.gmra.mxu0 %v562
    %v592 = vpop.f32.mrf.mxu0
    %v593 = vadd.f32 %v99, %v592
    %594 = vmatmul.f32.gmra.mxu0 %v564
    %v595 = vpop.f32.mrf.mxu0
    %v596 = vadd.f32 %v100, %v595
    %597 = vdwg.mxu0
    %vm598 = vcmask 162816
    %v599 = vsel %vm598, %v590, -inf
    %600 = vmax.xlane.f32.xlu0 %v599
    %v601 = vpop.xlane.xlu0 %600
    %v602 = vsel %vm598, %v593, -inf
    %603 = vmax.xlane.f32.xlu0 %v602
    %v604 = vpop.xlane.xlu0 %603
    %vm605 = vcmask 158720
    %v606 = vsel %vm605, %v596, -inf
    %607 = vmax.xlane.f32.xlu0 %v606
    %v608 = vpop.xlane.xlu0 %607
    %v609 = vsub.f32 %v590, %v601
    %v610 = vsub.f32 %v593, %v604
    %v611 = vsub.f32 %v596, %v608
    %v612 = vmul.f32 %v609, 1.442695
    %v613 = vpow.pop %v612
    %v614 = vmul.f32 %v610, 1.442695
    %v615 = vpow.pop %v614
    %v616 = vmul.f32 %v611, 1.442695
    %v617 = vpow.pop %v616
    %v618 = vsel %vm598, %v613, 0.0
    %619 = vadd.xlane.f32.xlu0 %v618
    %v620 = vpop.xlane.xlu0 %619
    %v621 = vsel %vm598, %v615, 0.0
    %622 = vadd.xlane.f32.xlu0 %v621
    %v623 = vpop.xlane.xlu0 %622
    %v624 = vsel %vm605, %v617, 0.0
    %625 = vadd.xlane.f32.xlu0 %v624
    %v626 = vpop.xlane.xlu0 %625
    %v627 = vrcp.pop %v620
    %v628 = vmul.f32 %v620, %v627
    %v629 = vsub.f32 1.0, %v628
    %v630 = vmul.f32 %v627, %v629
    %v631 = vadd.f32 %v627, %v630
    %vm632 = vweird.f32 %v620
    %vm633 = vweird.f32 %v627
    %vm634 = vmor %vm632, %vm633
    %v635 = vsel %vm634, %v627, %v631
    %v636 = vand.u32 2147483647, %v620
    %vm637 = vcmp.eq.f32.partialorder %v636, 8.507059e+37
    %v638 = vand.u32 %v620, 2147483648
    %v639 = vor.u32 1.1754944e-38, %v638
    %v640 = vsel %vm637, %v639, %v635
    %v641 = vmul.f32 %v613, %v640
    %v642 = vrcp.pop %v623
    %v643 = vmul.f32 %v623, %v642
    %v644 = vsub.f32 1.0, %v643
    %v645 = vmul.f32 %v642, %v644
    %v646 = vadd.f32 %v642, %v645
    %vm647 = vweird.f32 %v623
    %vm648 = vweird.f32 %v642
    %vm649 = vmor %vm647, %vm648
    %v650 = vsel %vm649, %v642, %v646
    %v651 = vand.u32 2147483647, %v623
    %vm652 = vcmp.eq.f32.partialorder %v651, 8.507059e+37
    %v653 = vand.u32 %v623, 2147483648
    %v654 = vor.u32 1.1754944e-38, %v653
    %v655 = vsel %vm652, %v654, %v650
    %v656 = vmul.f32 %v615, %v655
    %v657 = vrcp.pop %v626
    %v658 = vmul.f32 %v626, %v657
    %v659 = vsub.f32 1.0, %v658
    %v660 = vmul.f32 %v657, %v659
    %v661 = vadd.f32 %v657, %v660
    %vm662 = vweird.f32 %v626
    %vm663 = vweird.f32 %v657
    %vm664 = vmor %vm662, %vm663
    %v665 = vsel %vm664, %v657, %v661
    %v666 = vand.u32 2147483647, %v626
    %vm667 = vcmp.eq.f32.partialorder %v666, 8.507059e+37
    %v668 = vand.u32 %v626, 2147483648
    %v669 = vor.u32 1.1754944e-38, %v668
    %v670 = vsel %vm667, %v669, %v665
    %v671 = vmul.f32 %v617, %v670
    %672 = vrot.lane.b32.xlu0 %v438, 120
    %v673 = vpop.permute.xlu0 %672
    %674 = vrot.lane.b32.xlu0 %v441, 120
    %v675 = vpop.permute.xlu0 %674
    %676 = vrot.lane.b32.xlu0 %v444, 120
    %v677 = vpop.permute.xlu0 %676
    %678 = vrot.lane.b32.xlu0 %v438, 56
    %v679 = vpop.permute.xlu0 %678
    %680 = vrot.lane.b32.xlu0 %v441, 56
    %v681 = vpop.permute.xlu0 %680
    %682 = vrot.lane.b32.xlu0 %v444, 56
    %v683 = vpop.permute.xlu0 %682
    %v684 = vsel %vm559, %v673, 0
    %v686 = vsel %vm559, %v675, 0
    %v688 = vsel %vm559, %v677, 0
    %v690 = vsel %vm559, %v679, 0
    %v692 = vsel %vm559, %v681, 0
    %v694 = vsel %vm559, %v683, 0
    %696 = vmatpush.xpose.msra.mxu0 0.0
    %697 = vmatpush.xpose.msra.mxu0 0.0
    %698 = vmatpush.xpose.msra.mxu0 0.0
    %699 = vmatpush.xpose.msra.mxu0 0.0
    %700 = vmatpush.xpose.msra.mxu0 0.0
    %701 = vmatpush.xpose.msra.mxu0 0.0
    %702 = vmatpush.xpose.msra.mxu0 0.0
    %703 = vmatpush.xpose.msra.mxu0 0.0
    %704 = vmatpush.xpose.msra.mxu0 0.0
    %705 = vmatpush.xpose.msra.mxu0 0.0
    %706 = vmatpush.xpose.msra.mxu0 0.0
    %707 = vmatpush.xpose.msra.mxu0 0.0
    %708 = vmatpush.xpose.msra.mxu0 0.0
    %709 = vmatpush.xpose.msra.mxu0 %v694
    %710 = vmatpush.xpose.msra.mxu0 %v692
    %711 = vmatpush.xpose.msra.mxu0 %v690
    %712 = vmatmul.f32.gmra.mxu0 %v684
    %v713 = vpop.f32.mrf.mxu0
    %v714 = vadd.f32 %v98, %v713
    %715 = vmatmul.f32.gmra.mxu0 %v686
    %v716 = vpop.f32.mrf.mxu0
    %v717 = vadd.f32 %v99, %v716
    %718 = vmatmul.f32.gmra.mxu0 %v688
    %v719 = vpop.f32.mrf.mxu0
    %v720 = vadd.f32 %v100, %v719
    %721 = vdwg.mxu0
    %v722 = vsel %vm598, %v714, -inf
    %723 = vmax.xlane.f32.xlu0 %v722
    %v724 = vpop.xlane.xlu0 %723
    %v725 = vsel %vm598, %v717, -inf
    %726 = vmax.xlane.f32.xlu0 %v725
    %v727 = vpop.xlane.xlu0 %726
    %v728 = vsel %vm605, %v720, -inf
    %729 = vmax.xlane.f32.xlu0 %v728
    %v730 = vpop.xlane.xlu0 %729
    %v731 = vsub.f32 %v714, %v724
    %v732 = vsub.f32 %v717, %v727
    %v733 = vsub.f32 %v720, %v730
    %v734 = vmul.f32 %v731, 1.442695
    %v735 = vpow.pop %v734
    %v736 = vmul.f32 %v732, 1.442695
    %v737 = vpow.pop %v736
    %v738 = vmul.f32 %v733, 1.442695
    %v739 = vpow.pop %v738
    %v740 = vsel %vm598, %v735, 0.0
    %741 = vadd.xlane.f32.xlu0 %v740
    %v742 = vpop.xlane.xlu0 %741
    %v743 = vsel %vm598, %v737, 0.0
    %744 = vadd.xlane.f32.xlu0 %v743
    %v745 = vpop.xlane.xlu0 %744
    %v746 = vsel %vm605, %v739, 0.0
    %747 = vadd.xlane.f32.xlu0 %v746
    %v748 = vpop.xlane.xlu0 %747
    %v749 = vrcp.pop %v742
    %v750 = vmul.f32 %v742, %v749
    %v751 = vsub.f32 1.0, %v750
    %v752 = vmul.f32 %v749, %v751
    %v753 = vadd.f32 %v749, %v752
    %vm754 = vweird.f32 %v742
    %vm755 = vweird.f32 %v749
    %vm756 = vmor %vm754, %vm755
    %v757 = vsel %vm756, %v749, %v753
    %v758 = vand.u32 2147483647, %v742
    %vm759 = vcmp.eq.f32.partialorder %v758, 8.507059e+37
    %v760 = vand.u32 %v742, 2147483648
    %v761 = vor.u32 1.1754944e-38, %v760
    %v762 = vsel %vm759, %v761, %v757
    %v763 = vmul.f32 %v735, %v762
    %v764 = vrcp.pop %v745
    %v765 = vmul.f32 %v745, %v764
    %v766 = vsub.f32 1.0, %v765
    %v767 = vmul.f32 %v764, %v766
    %v768 = vadd.f32 %v764, %v767
    %vm769 = vweird.f32 %v745
    %vm770 = vweird.f32 %v764
    %vm771 = vmor %vm769, %vm770
    %v772 = vsel %vm771, %v764, %v768
    %v773 = vand.u32 2147483647, %v745
    %vm774 = vcmp.eq.f32.partialorder %v773, 8.507059e+37
    %v775 = vand.u32 %v745, 2147483648
    %v776 = vor.u32 1.1754944e-38, %v775
    %v777 = vsel %vm774, %v776, %v772
    %v778 = vmul.f32 %v737, %v777
    %v779 = vrcp.pop %v748
    %v780 = vmul.f32 %v748, %v779
    %v781 = vsub.f32 1.0, %v780
    %v782 = vmul.f32 %v779, %v781
    %v783 = vadd.f32 %v779, %v782
    %vm784 = vweird.f32 %v748
    %vm785 = vweird.f32 %v779
    %vm786 = vmor %vm784, %vm785
    %v787 = vsel %vm786, %v779, %v783
    %v788 = vand.u32 2147483647, %v748
    %vm789 = vcmp.eq.f32.partialorder %v788, 8.507059e+37
    %v790 = vand.u32 %v748, 2147483648
    %v791 = vor.u32 1.1754944e-38, %v790
    %v792 = vsel %vm789, %v791, %v787
    %v793 = vmul.f32 %v739, %v792
    %797 = vrot.lane.b32.xlu0 %v464, 64
    %v798 = vpop.permute.xlu0 %797
    %799 = vrot.lane.b32.xlu0 %v467, 64
    %v800 = vpop.permute.xlu0 %799
    %801 = vrot.lane.b32.xlu0 %v470, 64
    %v802 = vpop.permute.xlu0 %801
    %v806 = vsel %vm598, %v763, 0
    %v809 = vsel %vm598, %v778, 0
    %v812 = vsel %vm598, %v793, 0
    %vm814 = vcmask 1043456
    %v815 = vsel %vm814, %v802, 0
    %817 = vmatpush.msra.mxu0 0.0
    %818 = vmatpush.msra.mxu0 0.0
    %819 = vmatpush.msra.mxu0 0.0
    %820 = vmatpush.msra.mxu0 0.0
    %821 = vmatpush.msra.mxu0 0.0
    %822 = vmatpush.msra.mxu0 0.0
    %823 = vmatpush.msra.mxu0 0.0
    %824 = vmatpush.msra.mxu0 0.0
    %825 = vmatpush.msra.mxu0 0.0
    %826 = vmatpush.msra.mxu0 0.0
    %827 = vmatpush.msra.mxu0 0.0
    %828 = vmatpush.msra.mxu0 0.0
    %829 = vmatpush.msra.mxu0 0.0
    %830 = vmatpush.msra.mxu0 %v815
    %831 = vmatpush.msra.mxu0 %v800
    %832 = vmatpush.msra.mxu0 %v798
    %833 = vmatmul.f32.gmra.mxu0 %v806
    %v834 = vpop.f32.mrf.mxu0
    %v835 = vadd.f32 0.0, %v834
    %836 = vmatmul.f32.gmra.mxu0 %v809
    %v837 = vpop.f32.mrf.mxu0
    %v838 = vadd.f32 0.0, %v837
    %839 = vmatmul.f32.gmra.mxu0 %v812
    %v840 = vpop.f32.mrf.mxu0
    %v841 = vadd.f32 0.0, %v840
    %842 = vdwg.mxu0
    %v844 = vsel %vm598, %v641, 0
    %v847 = vsel %vm598, %v656, 0
    %v850 = vsel %vm598, %v671, 0
    %v852 = vsel %vm814, %v470, 0
    %854 = vmatpush.msra.mxu0 0.0
    %855 = vmatpush.msra.mxu0 0.0
    %856 = vmatpush.msra.mxu0 0.0
    %857 = vmatpush.msra.mxu0 0.0
    %858 = vmatpush.msra.mxu0 0.0
    %859 = vmatpush.msra.mxu0 0.0
    %860 = vmatpush.msra.mxu0 0.0
    %861 = vmatpush.msra.mxu0 0.0
    %862 = vmatpush.msra.mxu0 0.0
    %863 = vmatpush.msra.mxu0 0.0
    %864 = vmatpush.msra.mxu0 0.0
    %865 = vmatpush.msra.mxu0 0.0
    %866 = vmatpush.msra.mxu0 0.0
    %867 = vmatpush.msra.mxu0 %v852
    %868 = vmatpush.msra.mxu0 %v467
    %869 = vmatpush.msra.mxu0 %v464
    %870 = vmatmul.f32.gmra.mxu0 %v844
    %v871 = vpop.f32.mrf.mxu0
    %v872 = vadd.f32 %v835, %v871
    %873 = vmatmul.f32.gmra.mxu0 %v847
    %v874 = vpop.f32.mrf.mxu0
    %v875 = vadd.f32 %v838, %v874
    %876 = vmatmul.f32.gmra.mxu0 %v850
    %v877 = vpop.f32.mrf.mxu0
    %v878 = vadd.f32 %v841, %v877
    %879 = vdwg.mxu0
    %880 = vrot.lane.b32.xlu0 %v438, 112
    %v881 = vpop.permute.xlu0 %880
    %882 = vrot.lane.b32.xlu0 %v441, 112
    %v883 = vpop.permute.xlu0 %882
    %884 = vrot.lane.b32.xlu0 %v444, 112
    %v885 = vpop.permute.xlu0 %884
    %886 = vrot.lane.b32.xlu0 %v438, 48
    %v887 = vpop.permute.xlu0 %886
    %888 = vrot.lane.b32.xlu0 %v441, 48
    %v889 = vpop.permute.xlu0 %888
    %890 = vrot.lane.b32.xlu0 %v444, 48
    %v891 = vpop.permute.xlu0 %890
    %v892 = vsel %vm559, %v881, 0
    %v894 = vsel %vm559, %v883, 0
    %v896 = vsel %vm559, %v885, 0
    %v898 = vsel %vm559, %v887, 0
    %v900 = vsel %vm559, %v889, 0
    %v902 = vsel %vm559, %v891, 0
    %904 = vmatpush.xpose.msra.mxu0 0.0
    %905 = vmatpush.xpose.msra.mxu0 0.0
    %906 = vmatpush.xpose.msra.mxu0 0.0
    %907 = vmatpush.xpose.msra.mxu0 0.0
    %908 = vmatpush.xpose.msra.mxu0 0.0
    %909 = vmatpush.xpose.msra.mxu0 0.0
    %910 = vmatpush.xpose.msra.mxu0 0.0
    %911 = vmatpush.xpose.msra.mxu0 0.0
    %912 = vmatpush.xpose.msra.mxu0 0.0
    %913 = vmatpush.xpose.msra.mxu0 0.0
    %914 = vmatpush.xpose.msra.mxu0 0.0
    %915 = vmatpush.xpose.msra.mxu0 0.0
    %916 = vmatpush.xpose.msra.mxu0 0.0
    %917 = vmatpush.xpose.msra.mxu0 %v902
    %918 = vmatpush.xpose.msra.mxu0 %v900
    %919 = vmatpush.xpose.msra.mxu0 %v898
    %920 = vmatmul.f32.gmra.mxu0 %v892
    %v921 = vpop.f32.mrf.mxu0
    %v922 = vadd.f32 %v98, %v921
    %923 = vmatmul.f32.gmra.mxu0 %v894
    %v924 = vpop.f32.mrf.mxu0
    %v925 = vadd.f32 %v99, %v924
    %926 = vmatmul.f32.gmra.mxu0 %v896
    %v927 = vpop.f32.mrf.mxu0
    %v928 = vadd.f32 %v100, %v927
    %929 = vdwg.mxu0
    %v930 = vsel %vm598, %v922, -inf
    %931 = vmax.xlane.f32.xlu0 %v930
    %v932 = vpop.xlane.xlu0 %931
    %v933 = vsel %vm598, %v925, -inf
    %934 = vmax.xlane.f32.xlu0 %v933
    %v935 = vpop.xlane.xlu0 %934
    %v936 = vsel %vm605, %v928, -inf
    %937 = vmax.xlane.f32.xlu0 %v936
    %v938 = vpop.xlane.xlu0 %937
    %v939 = vsub.f32 %v922, %v932
    %v940 = vsub.f32 %v925, %v935
    %v941 = vsub.f32 %v928, %v938
    %v942 = vmul.f32 %v939, 1.442695
    %v943 = vpow.pop %v942
    %v944 = vmul.f32 %v940, 1.442695
    %v945 = vpow.pop %v944
    %v946 = vmul.f32 %v941, 1.442695
    %v947 = vpow.pop %v946
    %v948 = vsel %vm598, %v943, 0.0
    %949 = vadd.xlane.f32.xlu0 %v948
    %v950 = vpop.xlane.xlu0 %949
    %v951 = vsel %vm598, %v945, 0.0
    %952 = vadd.xlane.f32.xlu0 %v951
    %v953 = vpop.xlane.xlu0 %952
    %v954 = vsel %vm605, %v947, 0.0
    %955 = vadd.xlane.f32.xlu0 %v954
    %v956 = vpop.xlane.xlu0 %955
    %v957 = vrcp.pop %v950
    %v958 = vmul.f32 %v950, %v957
    %v959 = vsub.f32 1.0, %v958
    %v960 = vmul.f32 %v957, %v959
    %v961 = vadd.f32 %v957, %v960
    %vm962 = vweird.f32 %v950
    %vm963 = vweird.f32 %v957
    %vm964 = vmor %vm962, %vm963
    %v965 = vsel %vm964, %v957, %v961
    %v966 = vand.u32 2147483647, %v950
    %vm967 = vcmp.eq.f32.partialorder %v966, 8.507059e+37
    %v968 = vand.u32 %v950, 2147483648
    %v969 = vor.u32 1.1754944e-38, %v968
    %v970 = vsel %vm967, %v969, %v965
    %v971 = vmul.f32 %v943, %v970
    %v972 = vrcp.pop %v953
    %v973 = vmul.f32 %v953, %v972
    %v974 = vsub.f32 1.0, %v973
    %v975 = vmul.f32 %v972, %v974
    %v976 = vadd.f32 %v972, %v975
    %vm977 = vweird.f32 %v953
    %vm978 = vweird.f32 %v972
    %vm979 = vmor %vm977, %vm978
    %v980 = vsel %vm979, %v972, %v976
    %v981 = vand.u32 2147483647, %v953
    %vm982 = vcmp.eq.f32.partialorder %v981, 8.507059e+37
    %v983 = vand.u32 %v953, 2147483648
    %v984 = vor.u32 1.1754944e-38, %v983
    %v985 = vsel %vm982, %v984, %v980
    %v986 = vmul.f32 %v945, %v985
    %v987 = vrcp.pop %v956
    %v988 = vmul.f32 %v956, %v987
    %v989 = vsub.f32 1.0, %v988
    %v990 = vmul.f32 %v987, %v989
    %v991 = vadd.f32 %v987, %v990
    %vm992 = vweird.f32 %v956
    %vm993 = vweird.f32 %v987
    %vm994 = vmor %vm992, %vm993
    %v995 = vsel %vm994, %v987, %v991
    %v996 = vand.u32 2147483647, %v956
    %vm997 = vcmp.eq.f32.partialorder %v996, 8.507059e+37
    %v998 = vand.u32 %v956, 2147483648
    %v999 = vor.u32 1.1754944e-38, %v998
    %v1000 = vsel %vm997, %v999, %v995
    %v1001 = vmul.f32 %v947, %v1000
    %v1003 = vsel %vm598, %v971, 0
    %v1006 = vsel %vm598, %v986, 0
    %v1009 = vsel %vm598, %v1001, 0
    %v1012 = vsel %vm814, %v496, 0
    %1014 = vmatpush.msra.mxu0 0.0
    %1015 = vmatpush.msra.mxu0 0.0
    %1016 = vmatpush.msra.mxu0 0.0
    %1017 = vmatpush.msra.mxu0 0.0
    %1018 = vmatpush.msra.mxu0 0.0
    %1019 = vmatpush.msra.mxu0 0.0
    %1020 = vmatpush.msra.mxu0 0.0
    %1021 = vmatpush.msra.mxu0 0.0
    %1022 = vmatpush.msra.mxu0 0.0
    %1023 = vmatpush.msra.mxu0 0.0
    %1024 = vmatpush.msra.mxu0 0.0
    %1025 = vmatpush.msra.mxu0 0.0
    %1026 = vmatpush.msra.mxu0 0.0
    %1027 = vmatpush.msra.mxu0 %v1012
    %1028 = vmatpush.msra.mxu0 %v493
    %1029 = vmatpush.msra.mxu0 %v490
    %1030 = vmatmul.f32.gmra.mxu0 %v1003
    %v1031 = vpop.f32.mrf.mxu0
    %v1032 = vadd.f32 0.0, %v1031
    %1033 = vmatmul.f32.gmra.mxu0 %v1006
    %v1034 = vpop.f32.mrf.mxu0
    %v1035 = vadd.f32 0.0, %v1034
    %1036 = vmatmul.f32.gmra.mxu0 %v1009
    %v1037 = vpop.f32.mrf.mxu0
    %v1038 = vadd.f32 0.0, %v1037
    %1039 = vdwg.mxu0
    %v1040 = vadd.f32 %v872, %v1032
    %v1041 = vadd.f32 %v875, %v1035
    %v1042 = vadd.f32 %v878, %v1038
    %1043 = vrot.lane.b32.xlu0 %v438, 104
    %v1044 = vpop.permute.xlu0 %1043
    %1045 = vrot.lane.b32.xlu0 %v441, 104
    %v1046 = vpop.permute.xlu0 %1045
    %1047 = vrot.lane.b32.xlu0 %v444, 104
    %v1048 = vpop.permute.xlu0 %1047
    %1049 = vrot.lane.b32.xlu0 %v438, 40
    %v1050 = vpop.permute.xlu0 %1049
    %1051 = vrot.lane.b32.xlu0 %v441, 40
    %v1052 = vpop.permute.xlu0 %1051
    %1053 = vrot.lane.b32.xlu0 %v444, 40
    %v1054 = vpop.permute.xlu0 %1053
    %v1055 = vsel %vm559, %v1044, 0
    %v1057 = vsel %vm559, %v1046, 0
    %v1059 = vsel %vm559, %v1048, 0
    %v1061 = vsel %vm559, %v1050, 0
    %v1063 = vsel %vm559, %v1052, 0
    %v1065 = vsel %vm559, %v1054, 0
    %1067 = vmatpush.xpose.msra.mxu0 0.0
    %1068 = vmatpush.xpose.msra.mxu0 0.0
    %1069 = vmatpush.xpose.msra.mxu0 0.0
    %1070 = vmatpush.xpose.msra.mxu0 0.0
    %1071 = vmatpush.xpose.msra.mxu0 0.0
    %1072 = vmatpush.xpose.msra.mxu0 0.0
    %1073 = vmatpush.xpose.msra.mxu0 0.0
    %1074 = vmatpush.xpose.msra.mxu0 0.0
    %1075 = vmatpush.xpose.msra.mxu0 0.0
    %1076 = vmatpush.xpose.msra.mxu0 0.0
    %1077 = vmatpush.xpose.msra.mxu0 0.0
    %1078 = vmatpush.xpose.msra.mxu0 0.0
    %1079 = vmatpush.xpose.msra.mxu0 0.0
    %1080 = vmatpush.xpose.msra.mxu0 %v1065
    %1081 = vmatpush.xpose.msra.mxu0 %v1063
    %1082 = vmatpush.xpose.msra.mxu0 %v1061
    %1083 = vmatmul.f32.gmra.mxu0 %v1055
    %v1084 = vpop.f32.mrf.mxu0
    %v1085 = vadd.f32 %v98, %v1084
    %1086 = vmatmul.f32.gmra.mxu0 %v1057
    %v1087 = vpop.f32.mrf.mxu0
    %v1088 = vadd.f32 %v99, %v1087
    %1089 = vmatmul.f32.gmra.mxu0 %v1059
    %v1090 = vpop.f32.mrf.mxu0
    %v1091 = vadd.f32 %v100, %v1090
    %1092 = vdwg.mxu0
    %v1093 = vsel %vm598, %v1085, -inf
    %1094 = vmax.xlane.f32.xlu0 %v1093
    %v1095 = vpop.xlane.xlu0 %1094
    %v1096 = vsel %vm598, %v1088, -inf
    %1097 = vmax.xlane.f32.xlu0 %v1096
    %v1098 = vpop.xlane.xlu0 %1097
    %v1099 = vsel %vm605, %v1091, -inf
    %1100 = vmax.xlane.f32.xlu0 %v1099
    %v1101 = vpop.xlane.xlu0 %1100
    %v1102 = vsub.f32 %v1085, %v1095
    %v1103 = vsub.f32 %v1088, %v1098
    %v1104 = vsub.f32 %v1091, %v1101
    %v1105 = vmul.f32 %v1102, 1.442695
    %v1106 = vpow.pop %v1105
    %v1107 = vmul.f32 %v1103, 1.442695
    %v1108 = vpow.pop %v1107
    %v1109 = vmul.f32 %v1104, 1.442695
    %v1110 = vpow.pop %v1109
    %v1111 = vsel %vm598, %v1106, 0.0
    %1112 = vadd.xlane.f32.xlu0 %v1111
    %v1113 = vpop.xlane.xlu0 %1112
    %v1114 = vsel %vm598, %v1108, 0.0
    %1115 = vadd.xlane.f32.xlu0 %v1114
    %v1116 = vpop.xlane.xlu0 %1115
    %v1117 = vsel %vm605, %v1110, 0.0
    %1118 = vadd.xlane.f32.xlu0 %v1117
    %v1119 = vpop.xlane.xlu0 %1118
    %v1120 = vrcp.pop %v1113
    %v1121 = vmul.f32 %v1113, %v1120
    %v1122 = vsub.f32 1.0, %v1121
    %v1123 = vmul.f32 %v1120, %v1122
    %v1124 = vadd.f32 %v1120, %v1123
    %vm1125 = vweird.f32 %v1113
    %vm1126 = vweird.f32 %v1120
    %vm1127 = vmor %vm1125, %vm1126
    %v1128 = vsel %vm1127, %v1120, %v1124
    %v1129 = vand.u32 2147483647, %v1113
    %vm1130 = vcmp.eq.f32.partialorder %v1129, 8.507059e+37
    %v1131 = vand.u32 %v1113, 2147483648
    %v1132 = vor.u32 1.1754944e-38, %v1131
    %v1133 = vsel %vm1130, %v1132, %v1128
    %v1134 = vmul.f32 %v1106, %v1133
    %v1135 = vrcp.pop %v1116
    %v1136 = vmul.f32 %v1116, %v1135
    %v1137 = vsub.f32 1.0, %v1136
    %v1138 = vmul.f32 %v1135, %v1137
    %v1139 = vadd.f32 %v1135, %v1138
    %vm1140 = vweird.f32 %v1116
    %vm1141 = vweird.f32 %v1135
    %vm1142 = vmor %vm1140, %vm1141
    %v1143 = vsel %vm1142, %v1135, %v1139
    %v1144 = vand.u32 2147483647, %v1116
    %vm1145 = vcmp.eq.f32.partialorder %v1144, 8.507059e+37
    %v1146 = vand.u32 %v1116, 2147483648
    %v1147 = vor.u32 1.1754944e-38, %v1146
    %v1148 = vsel %vm1145, %v1147, %v1143
    %v1149 = vmul.f32 %v1108, %v1148
    %v1150 = vrcp.pop %v1119
    %v1151 = vmul.f32 %v1119, %v1150
    %v1152 = vsub.f32 1.0, %v1151
    %v1153 = vmul.f32 %v1150, %v1152
    %v1154 = vadd.f32 %v1150, %v1153
    %vm1155 = vweird.f32 %v1119
    %vm1156 = vweird.f32 %v1150
    %vm1157 = vmor %vm1155, %vm1156
    %v1158 = vsel %vm1157, %v1150, %v1154
    %v1159 = vand.u32 2147483647, %v1119
    %vm1160 = vcmp.eq.f32.partialorder %v1159, 8.507059e+37
    %v1161 = vand.u32 %v1119, 2147483648
    %v1162 = vor.u32 1.1754944e-38, %v1161
    %v1163 = vsel %vm1160, %v1162, %v1158
    %v1164 = vmul.f32 %v1110, %v1163
    %1167 = vrot.lane.b32.xlu0 %v490, 64
    %v1168 = vpop.permute.xlu0 %1167
    %1169 = vrot.lane.b32.xlu0 %v493, 64
    %v1170 = vpop.permute.xlu0 %1169
    %1171 = vrot.lane.b32.xlu0 %v496, 64
    %v1172 = vpop.permute.xlu0 %1171
    %v1176 = vsel %vm598, %v1134, 0
    %v1179 = vsel %vm598, %v1149, 0
    %v1182 = vsel %vm598, %v1164, 0
    %v1184 = vsel %vm814, %v1172, 0
    %1186 = vmatpush.msra.mxu0 0.0
    %1187 = vmatpush.msra.mxu0 0.0
    %1188 = vmatpush.msra.mxu0 0.0
    %1189 = vmatpush.msra.mxu0 0.0
    %1190 = vmatpush.msra.mxu0 0.0
    %1191 = vmatpush.msra.mxu0 0.0
    %1192 = vmatpush.msra.mxu0 0.0
    %1193 = vmatpush.msra.mxu0 0.0
    %1194 = vmatpush.msra.mxu0 0.0
    %1195 = vmatpush.msra.mxu0 0.0
    %1196 = vmatpush.msra.mxu0 0.0
    %1197 = vmatpush.msra.mxu0 0.0
    %1198 = vmatpush.msra.mxu0 0.0
    %1199 = vmatpush.msra.mxu0 %v1184
    %1200 = vmatpush.msra.mxu0 %v1170
    %1201 = vmatpush.msra.mxu0 %v1168
    %1202 = vmatmul.f32.gmra.mxu0 %v1176
    %v1203 = vpop.f32.mrf.mxu0
    %v1204 = vadd.f32 0.0, %v1203
    %1205 = vmatmul.f32.gmra.mxu0 %v1179
    %v1206 = vpop.f32.mrf.mxu0
    %v1207 = vadd.f32 0.0, %v1206
    %1208 = vmatmul.f32.gmra.mxu0 %v1182
    %v1209 = vpop.f32.mrf.mxu0
    %v1210 = vadd.f32 0.0, %v1209
    %1211 = vdwg.mxu0
    %v1212 = vadd.f32 %v1040, %v1204
    %v1213 = vadd.f32 %v1041, %v1207
    %v1214 = vadd.f32 %v1042, %v1210
    %1215 = vrot.lane.b32.xlu0 %v438, 96
    %v1216 = vpop.permute.xlu0 %1215
    %1217 = vrot.lane.b32.xlu0 %v441, 96
    %v1218 = vpop.permute.xlu0 %1217
    %1219 = vrot.lane.b32.xlu0 %v444, 96
    %v1220 = vpop.permute.xlu0 %1219
    %1221 = vrot.lane.b32.xlu0 %v438, 32
    %v1222 = vpop.permute.xlu0 %1221
    %1223 = vrot.lane.b32.xlu0 %v441, 32
    %v1224 = vpop.permute.xlu0 %1223
    %1225 = vrot.lane.b32.xlu0 %v444, 32
    %v1226 = vpop.permute.xlu0 %1225
    %v1227 = vsel %vm559, %v1216, 0
    %v1229 = vsel %vm559, %v1218, 0
    %v1231 = vsel %vm559, %v1220, 0
    %v1233 = vsel %vm559, %v1222, 0
    %v1235 = vsel %vm559, %v1224, 0
    %v1237 = vsel %vm559, %v1226, 0
    %1239 = vmatpush.xpose.msra.mxu0 0.0
    %1240 = vmatpush.xpose.msra.mxu0 0.0
    %1241 = vmatpush.xpose.msra.mxu0 0.0
    %1242 = vmatpush.xpose.msra.mxu0 0.0
    %1243 = vmatpush.xpose.msra.mxu0 0.0
    %1244 = vmatpush.xpose.msra.mxu0 0.0
    %1245 = vmatpush.xpose.msra.mxu0 0.0
    %1246 = vmatpush.xpose.msra.mxu0 0.0
    %1247 = vmatpush.xpose.msra.mxu0 0.0
    %1248 = vmatpush.xpose.msra.mxu0 0.0
    %1249 = vmatpush.xpose.msra.mxu0 0.0
    %1250 = vmatpush.xpose.msra.mxu0 0.0
    %1251 = vmatpush.xpose.msra.mxu0 0.0
    %1252 = vmatpush.xpose.msra.mxu0 %v1237
    %1253 = vmatpush.xpose.msra.mxu0 %v1235
    %1254 = vmatpush.xpose.msra.mxu0 %v1233
    %1255 = vmatmul.f32.gmra.mxu0 %v1227
    %v1256 = vpop.f32.mrf.mxu0
    %v1257 = vadd.f32 %v98, %v1256
    %1258 = vmatmul.f32.gmra.mxu0 %v1229
    %v1259 = vpop.f32.mrf.mxu0
    %v1260 = vadd.f32 %v99, %v1259
    %1261 = vmatmul.f32.gmra.mxu0 %v1231
    %v1262 = vpop.f32.mrf.mxu0
    %v1263 = vadd.f32 %v100, %v1262
    %1264 = vdwg.mxu0
    %v1265 = vsel %vm598, %v1257, -inf
    %1266 = vmax.xlane.f32.xlu0 %v1265
    %v1267 = vpop.xlane.xlu0 %1266
    %v1268 = vsel %vm598, %v1260, -inf
    %1269 = vmax.xlane.f32.xlu0 %v1268
    %v1270 = vpop.xlane.xlu0 %1269
    %v1271 = vsel %vm605, %v1263, -inf
    %1272 = vmax.xlane.f32.xlu0 %v1271
    %v1273 = vpop.xlane.xlu0 %1272
    %v1274 = vsub.f32 %v1257, %v1267
    %v1275 = vsub.f32 %v1260, %v1270
    %v1276 = vsub.f32 %v1263, %v1273
    %v1277 = vmul.f32 %v1274, 1.442695
    %v1278 = vpow.pop %v1277
    %v1279 = vmul.f32 %v1275, 1.442695
    %v1280 = vpow.pop %v1279
    %v1281 = vmul.f32 %v1276, 1.442695
    %v1282 = vpow.pop %v1281
    %v1283 = vsel %vm598, %v1278, 0.0
    %1284 = vadd.xlane.f32.xlu0 %v1283
    %v1285 = vpop.xlane.xlu0 %1284
    %v1286 = vsel %vm598, %v1280, 0.0
    %1287 = vadd.xlane.f32.xlu0 %v1286
    %v1288 = vpop.xlane.xlu0 %1287
    %v1289 = vsel %vm605, %v1282, 0.0
    %1290 = vadd.xlane.f32.xlu0 %v1289
    %v1291 = vpop.xlane.xlu0 %1290
    %v1292 = vrcp.pop %v1285
    %v1293 = vmul.f32 %v1285, %v1292
    %v1294 = vsub.f32 1.0, %v1293
    %v1295 = vmul.f32 %v1292, %v1294
    %v1296 = vadd.f32 %v1292, %v1295
    %vm1297 = vweird.f32 %v1285
    %vm1298 = vweird.f32 %v1292
    %vm1299 = vmor %vm1297, %vm1298
    %v1300 = vsel %vm1299, %v1292, %v1296
    %v1301 = vand.u32 2147483647, %v1285
    %vm1302 = vcmp.eq.f32.partialorder %v1301, 8.507059e+37
    %v1303 = vand.u32 %v1285, 2147483648
    %v1304 = vor.u32 1.1754944e-38, %v1303
    %v1305 = vsel %vm1302, %v1304, %v1300
    %v1306 = vmul.f32 %v1278, %v1305
    %v1307 = vrcp.pop %v1288
    %v1308 = vmul.f32 %v1288, %v1307
    %v1309 = vsub.f32 1.0, %v1308
    %v1310 = vmul.f32 %v1307, %v1309
    %v1311 = vadd.f32 %v1307, %v1310
    %vm1312 = vweird.f32 %v1288
    %vm1313 = vweird.f32 %v1307
    %vm1314 = vmor %vm1312, %vm1313
    %v1315 = vsel %vm1314, %v1307, %v1311
    %v1316 = vand.u32 2147483647, %v1288
    %vm1317 = vcmp.eq.f32.partialorder %v1316, 8.507059e+37
    %v1318 = vand.u32 %v1288, 2147483648
    %v1319 = vor.u32 1.1754944e-38, %v1318
    %v1320 = vsel %vm1317, %v1319, %v1315
    %v1321 = vmul.f32 %v1280, %v1320
    %v1322 = vrcp.pop %v1291
    %v1323 = vmul.f32 %v1291, %v1322
    %v1324 = vsub.f32 1.0, %v1323
    %v1325 = vmul.f32 %v1322, %v1324
    %v1326 = vadd.f32 %v1322, %v1325
    %vm1327 = vweird.f32 %v1291
    %vm1328 = vweird.f32 %v1322
    %vm1329 = vmor %vm1327, %vm1328
    %v1330 = vsel %vm1329, %v1322, %v1326
    %v1331 = vand.u32 2147483647, %v1291
    %vm1332 = vcmp.eq.f32.partialorder %v1331, 8.507059e+37
    %v1333 = vand.u32 %v1291, 2147483648
    %v1334 = vor.u32 1.1754944e-38, %v1333
    %v1335 = vsel %vm1332, %v1334, %v1330
    %v1336 = vmul.f32 %v1282, %v1335
    %v1338 = vsel %vm598, %v1306, 0
    %v1341 = vsel %vm598, %v1321, 0
    %v1344 = vsel %vm598, %v1336, 0
    %v1347 = vsel %vm814, %v522, 0
    %1349 = vmatpush.msra.mxu0 0.0
    %1350 = vmatpush.msra.mxu0 0.0
    %1351 = vmatpush.msra.mxu0 0.0
    %1352 = vmatpush.msra.mxu0 0.0
    %1353 = vmatpush.msra.mxu0 0.0
    %1354 = vmatpush.msra.mxu0 0.0
    %1355 = vmatpush.msra.mxu0 0.0
    %1356 = vmatpush.msra.mxu0 0.0
    %1357 = vmatpush.msra.mxu0 0.0
    %1358 = vmatpush.msra.mxu0 0.0
    %1359 = vmatpush.msra.mxu0 0.0
    %1360 = vmatpush.msra.mxu0 0.0
    %1361 = vmatpush.msra.mxu0 0.0
    %1362 = vmatpush.msra.mxu0 %v1347
    %1363 = vmatpush.msra.mxu0 %v519
    %1364 = vmatpush.msra.mxu0 %v516
    %1365 = vmatmul.f32.gmra.mxu0 %v1338
    %v1366 = vpop.f32.mrf.mxu0
    %v1367 = vadd.f32 0.0, %v1366
    %1368 = vmatmul.f32.gmra.mxu0 %v1341
    %v1369 = vpop.f32.mrf.mxu0
    %v1370 = vadd.f32 0.0, %v1369
    %1371 = vmatmul.f32.gmra.mxu0 %v1344
    %v1372 = vpop.f32.mrf.mxu0
    %v1373 = vadd.f32 0.0, %v1372
    %1374 = vdwg.mxu0
    %v1375 = vadd.f32 %v1212, %v1367
    %v1376 = vadd.f32 %v1213, %v1370
    %v1377 = vadd.f32 %v1214, %v1373
    %1378 = vrot.lane.b32.xlu0 %v438, 88
    %v1379 = vpop.permute.xlu0 %1378
    %1380 = vrot.lane.b32.xlu0 %v441, 88
    %v1381 = vpop.permute.xlu0 %1380
    %1382 = vrot.lane.b32.xlu0 %v444, 88
    %v1383 = vpop.permute.xlu0 %1382
    %1384 = vrot.lane.b32.xlu0 %v438, 24
    %v1385 = vpop.permute.xlu0 %1384
    %1386 = vrot.lane.b32.xlu0 %v441, 24
    %v1387 = vpop.permute.xlu0 %1386
    %1388 = vrot.lane.b32.xlu0 %v444, 24
    %v1389 = vpop.permute.xlu0 %1388
    %v1390 = vsel %vm559, %v1379, 0
    %v1392 = vsel %vm559, %v1381, 0
    %v1394 = vsel %vm559, %v1383, 0
    %v1396 = vsel %vm559, %v1385, 0
    %v1398 = vsel %vm559, %v1387, 0
    %v1400 = vsel %vm559, %v1389, 0
    %1402 = vmatpush.xpose.msra.mxu0 0.0
    %1403 = vmatpush.xpose.msra.mxu0 0.0
    %1404 = vmatpush.xpose.msra.mxu0 0.0
    %1405 = vmatpush.xpose.msra.mxu0 0.0
    %1406 = vmatpush.xpose.msra.mxu0 0.0
    %1407 = vmatpush.xpose.msra.mxu0 0.0
    %1408 = vmatpush.xpose.msra.mxu0 0.0
    %1409 = vmatpush.xpose.msra.mxu0 0.0
    %1410 = vmatpush.xpose.msra.mxu0 0.0
    %1411 = vmatpush.xpose.msra.mxu0 0.0
    %1412 = vmatpush.xpose.msra.mxu0 0.0
    %1413 = vmatpush.xpose.msra.mxu0 0.0
    %1414 = vmatpush.xpose.msra.mxu0 0.0
    %1415 = vmatpush.xpose.msra.mxu0 %v1400
    %1416 = vmatpush.xpose.msra.mxu0 %v1398
    %1417 = vmatpush.xpose.msra.mxu0 %v1396
    %1418 = vmatmul.f32.gmra.mxu0 %v1390
    %v1419 = vpop.f32.mrf.mxu0
    %v1420 = vadd.f32 %v98, %v1419
    %1421 = vmatmul.f32.gmra.mxu0 %v1392
    %v1422 = vpop.f32.mrf.mxu0
    %v1423 = vadd.f32 %v99, %v1422
    %1424 = vmatmul.f32.gmra.mxu0 %v1394
    %v1425 = vpop.f32.mrf.mxu0
    %v1426 = vadd.f32 %v100, %v1425
    %1427 = vdwg.mxu0
    %v1428 = vsel %vm598, %v1420, -inf
    %1429 = vmax.xlane.f32.xlu0 %v1428
    %v1430 = vpop.xlane.xlu0 %1429
    %v1431 = vsel %vm598, %v1423, -inf
    %1432 = vmax.xlane.f32.xlu0 %v1431
    %v1433 = vpop.xlane.xlu0 %1432
    %v1434 = vsel %vm605, %v1426, -inf
    %1435 = vmax.xlane.f32.xlu0 %v1434
    %v1436 = vpop.xlane.xlu0 %1435
    %v1437 = vsub.f32 %v1420, %v1430
    %v1438 = vsub.f32 %v1423, %v1433
    %v1439 = vsub.f32 %v1426, %v1436
    %v1440 = vmul.f32 %v1437, 1.442695
    %v1441 = vpow.pop %v1440
    %v1442 = vmul.f32 %v1438, 1.442695
    %v1443 = vpow.pop %v1442
    %v1444 = vmul.f32 %v1439, 1.442695
    %v1445 = vpow.pop %v1444
    %v1446 = vsel %vm598, %v1441, 0.0
    %1447 = vadd.xlane.f32.xlu0 %v1446
    %v1448 = vpop.xlane.xlu0 %1447
    %v1449 = vsel %vm598, %v1443, 0.0
    %1450 = vadd.xlane.f32.xlu0 %v1449
    %v1451 = vpop.xlane.xlu0 %1450
    %v1452 = vsel %vm605, %v1445, 0.0
    %1453 = vadd.xlane.f32.xlu0 %v1452
    %v1454 = vpop.xlane.xlu0 %1453
    %v1455 = vrcp.pop %v1448
    %v1456 = vmul.f32 %v1448, %v1455
    %v1457 = vsub.f32 1.0, %v1456
    %v1458 = vmul.f32 %v1455, %v1457
    %v1459 = vadd.f32 %v1455, %v1458
    %vm1460 = vweird.f32 %v1448
    %vm1461 = vweird.f32 %v1455
    %vm1462 = vmor %vm1460, %vm1461
    %v1463 = vsel %vm1462, %v1455, %v1459
    %v1464 = vand.u32 2147483647, %v1448
    %vm1465 = vcmp.eq.f32.partialorder %v1464, 8.507059e+37
    %v1466 = vand.u32 %v1448, 2147483648
    %v1467 = vor.u32 1.1754944e-38, %v1466
    %v1468 = vsel %vm1465, %v1467, %v1463
    %v1469 = vmul.f32 %v1441, %v1468
    %v1470 = vrcp.pop %v1451
    %v1471 = vmul.f32 %v1451, %v1470
    %v1472 = vsub.f32 1.0, %v1471
    %v1473 = vmul.f32 %v1470, %v1472
    %v1474 = vadd.f32 %v1470, %v1473
    %vm1475 = vweird.f32 %v1451
    %vm1476 = vweird.f32 %v1470
    %vm1477 = vmor %vm1475, %vm1476
    %v1478 = vsel %vm1477, %v1470, %v1474
    %v1479 = vand.u32 2147483647, %v1451
    %vm1480 = vcmp.eq.f32.partialorder %v1479, 8.507059e+37
    %v1481 = vand.u32 %v1451, 2147483648
    %v1482 = vor.u32 1.1754944e-38, %v1481
    %v1483 = vsel %vm1480, %v1482, %v1478
    %v1484 = vmul.f32 %v1443, %v1483
    %v1485 = vrcp.pop %v1454
    %v1486 = vmul.f32 %v1454, %v1485
    %v1487 = vsub.f32 1.0, %v1486
    %v1488 = vmul.f32 %v1485, %v1487
    %v1489 = vadd.f32 %v1485, %v1488
    %vm1490 = vweird.f32 %v1454
    %vm1491 = vweird.f32 %v1485
    %vm1492 = vmor %vm1490, %vm1491
    %v1493 = vsel %vm1492, %v1485, %v1489
    %v1494 = vand.u32 2147483647, %v1454
    %vm1495 = vcmp.eq.f32.partialorder %v1494, 8.507059e+37
    %v1496 = vand.u32 %v1454, 2147483648
    %v1497 = vor.u32 1.1754944e-38, %v1496
    %v1498 = vsel %vm1495, %v1497, %v1493
    %v1499 = vmul.f32 %v1445, %v1498
    %1502 = vrot.lane.b32.xlu0 %v516, 64
    %v1503 = vpop.permute.xlu0 %1502
    %1504 = vrot.lane.b32.xlu0 %v519, 64
    %v1505 = vpop.permute.xlu0 %1504
    %1506 = vrot.lane.b32.xlu0 %v522, 64
    %v1507 = vpop.permute.xlu0 %1506
    %v1511 = vsel %vm598, %v1469, 0
    %v1514 = vsel %vm598, %v1484, 0
    %v1517 = vsel %vm598, %v1499, 0
    %v1519 = vsel %vm814, %v1507, 0
    %1521 = vmatpush.msra.mxu0 0.0
    %1522 = vmatpush.msra.mxu0 0.0
    %1523 = vmatpush.msra.mxu0 0.0
    %1524 = vmatpush.msra.mxu0 0.0
    %1525 = vmatpush.msra.mxu0 0.0
    %1526 = vmatpush.msra.mxu0 0.0
    %1527 = vmatpush.msra.mxu0 0.0
    %1528 = vmatpush.msra.mxu0 0.0
    %1529 = vmatpush.msra.mxu0 0.0
    %1530 = vmatpush.msra.mxu0 0.0
    %1531 = vmatpush.msra.mxu0 0.0
    %1532 = vmatpush.msra.mxu0 0.0
    %1533 = vmatpush.msra.mxu0 0.0
    %1534 = vmatpush.msra.mxu0 %v1519
    %1535 = vmatpush.msra.mxu0 %v1505
    %1536 = vmatpush.msra.mxu0 %v1503
    %1537 = vmatmul.f32.gmra.mxu0 %v1511
    %v1538 = vpop.f32.mrf.mxu0
    %v1539 = vadd.f32 0.0, %v1538
    %1540 = vmatmul.f32.gmra.mxu0 %v1514
    %v1541 = vpop.f32.mrf.mxu0
    %v1542 = vadd.f32 0.0, %v1541
    %1543 = vmatmul.f32.gmra.mxu0 %v1517
    %v1544 = vpop.f32.mrf.mxu0
    %v1545 = vadd.f32 0.0, %v1544
    %1546 = vdwg.mxu0
    %v1547 = vadd.f32 %v1375, %v1539
    %v1548 = vadd.f32 %v1376, %v1542
    %v1549 = vadd.f32 %v1377, %v1545
    %1550 = vrot.lane.b32.xlu0 %v438, 80
    %v1551 = vpop.permute.xlu0 %1550
    %1552 = vrot.lane.b32.xlu0 %v441, 80
    %v1553 = vpop.permute.xlu0 %1552
    %1554 = vrot.lane.b32.xlu0 %v444, 80
    %v1555 = vpop.permute.xlu0 %1554
    %1556 = vrot.lane.b32.xlu0 %v438, 16
    %v1557 = vpop.permute.xlu0 %1556
    %1558 = vrot.lane.b32.xlu0 %v441, 16
    %v1559 = vpop.permute.xlu0 %1558
    %1560 = vrot.lane.b32.xlu0 %v444, 16
    %v1561 = vpop.permute.xlu0 %1560
    %v1562 = vsel %vm559, %v1551, 0
    %v1564 = vsel %vm559, %v1553, 0
    %v1566 = vsel %vm559, %v1555, 0
    %v1568 = vsel %vm559, %v1557, 0
    %v1570 = vsel %vm559, %v1559, 0
    %v1572 = vsel %vm559, %v1561, 0
    %1574 = vmatpush.xpose.msra.mxu0 0.0
    %1575 = vmatpush.xpose.msra.mxu0 0.0
    %1576 = vmatpush.xpose.msra.mxu0 0.0
    %1577 = vmatpush.xpose.msra.mxu0 0.0
    %1578 = vmatpush.xpose.msra.mxu0 0.0
    %1579 = vmatpush.xpose.msra.mxu0 0.0
    %1580 = vmatpush.xpose.msra.mxu0 0.0
    %1581 = vmatpush.xpose.msra.mxu0 0.0
    %1582 = vmatpush.xpose.msra.mxu0 0.0
    %1583 = vmatpush.xpose.msra.mxu0 0.0
    %1584 = vmatpush.xpose.msra.mxu0 0.0
    %1585 = vmatpush.xpose.msra.mxu0 0.0
    %1586 = vmatpush.xpose.msra.mxu0 0.0
    %1587 = vmatpush.xpose.msra.mxu0 %v1572
    %1588 = vmatpush.xpose.msra.mxu0 %v1570
    %1589 = vmatpush.xpose.msra.mxu0 %v1568
    %1590 = vmatmul.f32.gmra.mxu0 %v1562
    %v1591 = vpop.f32.mrf.mxu0
    %v1592 = vadd.f32 %v98, %v1591
    %1593 = vmatmul.f32.gmra.mxu0 %v1564
    %v1594 = vpop.f32.mrf.mxu0
    %v1595 = vadd.f32 %v99, %v1594
    %1596 = vmatmul.f32.gmra.mxu0 %v1566
    %v1597 = vpop.f32.mrf.mxu0
    %v1598 = vadd.f32 %v100, %v1597
    %1599 = vdwg.mxu0
    %v1600 = vsel %vm598, %v1592, -inf
    %1601 = vmax.xlane.f32.xlu0 %v1600
    %v1602 = vpop.xlane.xlu0 %1601
    %v1603 = vsel %vm598, %v1595, -inf
    %1604 = vmax.xlane.f32.xlu0 %v1603
    %v1605 = vpop.xlane.xlu0 %1604
    %v1606 = vsel %vm605, %v1598, -inf
    %1607 = vmax.xlane.f32.xlu0 %v1606
    %v1608 = vpop.xlane.xlu0 %1607
    %v1609 = vsub.f32 %v1592, %v1602
    %v1610 = vsub.f32 %v1595, %v1605
    %v1611 = vsub.f32 %v1598, %v1608
    %v1612 = vmul.f32 %v1609, 1.442695
    %v1613 = vpow.pop %v1612
    %v1614 = vmul.f32 %v1610, 1.442695
    %v1615 = vpow.pop %v1614
    %v1616 = vmul.f32 %v1611, 1.442695
    %v1617 = vpow.pop %v1616
    %v1618 = vsel %vm598, %v1613, 0.0
    %1619 = vadd.xlane.f32.xlu0 %v1618
    %v1620 = vpop.xlane.xlu0 %1619
    %v1621 = vsel %vm598, %v1615, 0.0
    %1622 = vadd.xlane.f32.xlu0 %v1621
    %v1623 = vpop.xlane.xlu0 %1622
    %v1624 = vsel %vm605, %v1617, 0.0
    %1625 = vadd.xlane.f32.xlu0 %v1624
    %v1626 = vpop.xlane.xlu0 %1625
    %v1627 = vrcp.pop %v1620
    %v1628 = vmul.f32 %v1620, %v1627
    %v1629 = vsub.f32 1.0, %v1628
    %v1630 = vmul.f32 %v1627, %v1629
    %v1631 = vadd.f32 %v1627, %v1630
    %vm1632 = vweird.f32 %v1620
    %vm1633 = vweird.f32 %v1627
    %vm1634 = vmor %vm1632, %vm1633
    %v1635 = vsel %vm1634, %v1627, %v1631
    %v1636 = vand.u32 2147483647, %v1620
    %vm1637 = vcmp.eq.f32.partialorder %v1636, 8.507059e+37
    %v1638 = vand.u32 %v1620, 2147483648
    %v1639 = vor.u32 1.1754944e-38, %v1638
    %v1640 = vsel %vm1637, %v1639, %v1635
    %v1641 = vmul.f32 %v1613, %v1640
    %v1642 = vrcp.pop %v1623
    %v1643 = vmul.f32 %v1623, %v1642
    %v1644 = vsub.f32 1.0, %v1643
    %v1645 = vmul.f32 %v1642, %v1644
    %v1646 = vadd.f32 %v1642, %v1645
    %vm1647 = vweird.f32 %v1623
    %vm1648 = vweird.f32 %v1642
    %vm1649 = vmor %vm1647, %vm1648
    %v1650 = vsel %vm1649, %v1642, %v1646
    %v1651 = vand.u32 2147483647, %v1623
    %vm1652 = vcmp.eq.f32.partialorder %v1651, 8.507059e+37
    %v1653 = vand.u32 %v1623, 2147483648
    %v1654 = vor.u32 1.1754944e-38, %v1653
    %v1655 = vsel %vm1652, %v1654, %v1650
    %v1656 = vmul.f32 %v1615, %v1655
    %v1657 = vrcp.pop %v1626
    %v1658 = vmul.f32 %v1626, %v1657
    %v1659 = vsub.f32 1.0, %v1658
    %v1660 = vmul.f32 %v1657, %v1659
    %v1661 = vadd.f32 %v1657, %v1660
    %vm1662 = vweird.f32 %v1626
    %vm1663 = vweird.f32 %v1657
    %vm1664 = vmor %vm1662, %vm1663
    %v1665 = vsel %vm1664, %v1657, %v1661
    %v1666 = vand.u32 2147483647, %v1626
    %vm1667 = vcmp.eq.f32.partialorder %v1666, 8.507059e+37
    %v1668 = vand.u32 %v1626, 2147483648
    %v1669 = vor.u32 1.1754944e-38, %v1668
    %v1670 = vsel %vm1667, %v1669, %v1665
    %v1671 = vmul.f32 %v1617, %v1670
    %v1673 = vsel %vm598, %v1641, 0
    %v1676 = vsel %vm598, %v1656, 0
    %v1679 = vsel %vm598, %v1671, 0
    %v1682 = vsel %vm814, %v548, 0
    %1684 = vmatpush.msra.mxu0 0.0
    %1685 = vmatpush.msra.mxu0 0.0
    %1686 = vmatpush.msra.mxu0 0.0
    %1687 = vmatpush.msra.mxu0 0.0
    %1688 = vmatpush.msra.mxu0 0.0
    %1689 = vmatpush.msra.mxu0 0.0
    %1690 = vmatpush.msra.mxu0 0.0
    %1691 = vmatpush.msra.mxu0 0.0
    %1692 = vmatpush.msra.mxu0 0.0
    %1693 = vmatpush.msra.mxu0 0.0
    %1694 = vmatpush.msra.mxu0 0.0
    %1695 = vmatpush.msra.mxu0 0.0
    %1696 = vmatpush.msra.mxu0 0.0
    %1697 = vmatpush.msra.mxu0 %v1682
    %1698 = vmatpush.msra.mxu0 %v545
    %1699 = vmatpush.msra.mxu0 %v542
    %1700 = vmatmul.f32.gmra.mxu0 %v1673
    %v1701 = vpop.f32.mrf.mxu0
    %v1702 = vadd.f32 0.0, %v1701
    %1703 = vmatmul.f32.gmra.mxu0 %v1676
    %v1704 = vpop.f32.mrf.mxu0
    %v1705 = vadd.f32 0.0, %v1704
    %1706 = vmatmul.f32.gmra.mxu0 %v1679
    %v1707 = vpop.f32.mrf.mxu0
    %v1708 = vadd.f32 0.0, %v1707
    %1709 = vdwg.mxu0
    %v1710 = vadd.f32 %v1547, %v1702
    %v1711 = vadd.f32 %v1548, %v1705
    %v1712 = vadd.f32 %v1549, %v1708
    %1713 = vrot.lane.b32.xlu0 %v438, 72
    %v1714 = vpop.permute.xlu0 %1713
    %1715 = vrot.lane.b32.xlu0 %v441, 72
    %v1716 = vpop.permute.xlu0 %1715
    %1717 = vrot.lane.b32.xlu0 %v444, 72
    %v1718 = vpop.permute.xlu0 %1717
    %1719 = vrot.lane.b32.xlu0 %v438, 8
    %v1720 = vpop.permute.xlu0 %1719
    %1721 = vrot.lane.b32.xlu0 %v441, 8
    %v1722 = vpop.permute.xlu0 %1721
    %1723 = vrot.lane.b32.xlu0 %v444, 8
    %v1724 = vpop.permute.xlu0 %1723
    %v1725 = vsel %vm559, %v1714, 0
    %v1727 = vsel %vm559, %v1716, 0
    %v1729 = vsel %vm559, %v1718, 0
    %v1731 = vsel %vm559, %v1720, 0
    %v1733 = vsel %vm559, %v1722, 0
    %v1735 = vsel %vm559, %v1724, 0
    %1737 = vmatpush.xpose.msra.mxu0 0.0
    %1738 = vmatpush.xpose.msra.mxu0 0.0
    %1739 = vmatpush.xpose.msra.mxu0 0.0
    %1740 = vmatpush.xpose.msra.mxu0 0.0
    %1741 = vmatpush.xpose.msra.mxu0 0.0
    %1742 = vmatpush.xpose.msra.mxu0 0.0
    %1743 = vmatpush.xpose.msra.mxu0 0.0
    %1744 = vmatpush.xpose.msra.mxu0 0.0
    %1745 = vmatpush.xpose.msra.mxu0 0.0
    %1746 = vmatpush.xpose.msra.mxu0 0.0
    %1747 = vmatpush.xpose.msra.mxu0 0.0
    %1748 = vmatpush.xpose.msra.mxu0 0.0
    %1749 = vmatpush.xpose.msra.mxu0 0.0
    %1750 = vmatpush.xpose.msra.mxu0 %v1735
    %1751 = vmatpush.xpose.msra.mxu0 %v1733
    %1752 = vmatpush.xpose.msra.mxu0 %v1731
    %1753 = vmatmul.f32.gmra.mxu0 %v1725
    %v1754 = vpop.f32.mrf.mxu0
    %v1755 = vadd.f32 %v98, %v1754
    %1756 = vmatmul.f32.gmra.mxu0 %v1727
    %v1757 = vpop.f32.mrf.mxu0
    %v1758 = vadd.f32 %v99, %v1757
    %1759 = vmatmul.f32.gmra.mxu0 %v1729
    %v1760 = vpop.f32.mrf.mxu0
    %v1761 = vadd.f32 %v100, %v1760
    %1762 = vdwg.mxu0
    %v1763 = vsel %vm598, %v1755, -inf
    %1764 = vmax.xlane.f32.xlu0 %v1763
    %v1765 = vpop.xlane.xlu0 %1764
    %v1766 = vsel %vm598, %v1758, -inf
    %1767 = vmax.xlane.f32.xlu0 %v1766
    %v1768 = vpop.xlane.xlu0 %1767
    %v1769 = vsel %vm605, %v1761, -inf
    %1770 = vmax.xlane.f32.xlu0 %v1769
    %v1771 = vpop.xlane.xlu0 %1770
    %v1772 = vsub.f32 %v1755, %v1765
    %v1773 = vsub.f32 %v1758, %v1768
    %v1774 = vsub.f32 %v1761, %v1771
    %v1775 = vmul.f32 %v1772, 1.442695
    %v1776 = vpow.pop %v1775
    %v1777 = vmul.f32 %v1773, 1.442695
    %v1778 = vpow.pop %v1777
    %v1779 = vmul.f32 %v1774, 1.442695
    %v1780 = vpow.pop %v1779
    %v1781 = vsel %vm598, %v1776, 0.0
    %1782 = vadd.xlane.f32.xlu0 %v1781
    %v1783 = vpop.xlane.xlu0 %1782
    %v1784 = vsel %vm598, %v1778, 0.0
    %1785 = vadd.xlane.f32.xlu0 %v1784
    %v1786 = vpop.xlane.xlu0 %1785
    %v1787 = vsel %vm605, %v1780, 0.0
    %1788 = vadd.xlane.f32.xlu0 %v1787
    %v1789 = vpop.xlane.xlu0 %1788
    %v1790 = vrcp.pop %v1783
    %v1791 = vmul.f32 %v1783, %v1790
    %v1792 = vsub.f32 1.0, %v1791
    %v1793 = vmul.f32 %v1790, %v1792
    %v1794 = vadd.f32 %v1790, %v1793
    %vm1795 = vweird.f32 %v1783
    %vm1796 = vweird.f32 %v1790
    %vm1797 = vmor %vm1795, %vm1796
    %v1798 = vsel %vm1797, %v1790, %v1794
    %v1799 = vand.u32 2147483647, %v1783
    %vm1800 = vcmp.eq.f32.partialorder %v1799, 8.507059e+37
    %v1801 = vand.u32 %v1783, 2147483648
    %v1802 = vor.u32 1.1754944e-38, %v1801
    %v1803 = vsel %vm1800, %v1802, %v1798
    %v1804 = vmul.f32 %v1776, %v1803
    %v1805 = vrcp.pop %v1786
    %v1806 = vmul.f32 %v1786, %v1805
    %v1807 = vsub.f32 1.0, %v1806
    %v1808 = vmul.f32 %v1805, %v1807
    %v1809 = vadd.f32 %v1805, %v1808
    %vm1810 = vweird.f32 %v1786
    %vm1811 = vweird.f32 %v1805
    %vm1812 = vmor %vm1810, %vm1811
    %v1813 = vsel %vm1812, %v1805, %v1809
    %v1814 = vand.u32 2147483647, %v1786
    %vm1815 = vcmp.eq.f32.partialorder %v1814, 8.507059e+37
    %v1816 = vand.u32 %v1786, 2147483648
    %v1817 = vor.u32 1.1754944e-38, %v1816
    %v1818 = vsel %vm1815, %v1817, %v1813
    %v1819 = vmul.f32 %v1778, %v1818
    %v1820 = vrcp.pop %v1789
    %v1821 = vmul.f32 %v1789, %v1820
    %v1822 = vsub.f32 1.0, %v1821
    %v1823 = vmul.f32 %v1820, %v1822
    %v1824 = vadd.f32 %v1820, %v1823
    %vm1825 = vweird.f32 %v1789
    %vm1826 = vweird.f32 %v1820
    %vm1827 = vmor %vm1825, %vm1826
    %v1828 = vsel %vm1827, %v1820, %v1824
    %v1829 = vand.u32 2147483647, %v1789
    %vm1830 = vcmp.eq.f32.partialorder %v1829, 8.507059e+37
    %v1831 = vand.u32 %v1789, 2147483648
    %v1832 = vor.u32 1.1754944e-38, %v1831
    %v1833 = vsel %vm1830, %v1832, %v1828
    %v1834 = vmul.f32 %v1780, %v1833
    %1837 = vrot.lane.b32.xlu0 %v542, 64
    %v1838 = vpop.permute.xlu0 %1837
    %1839 = vrot.lane.b32.xlu0 %v545, 64
    %v1840 = vpop.permute.xlu0 %1839
    %1841 = vrot.lane.b32.xlu0 %v548, 64
    %v1842 = vpop.permute.xlu0 %1841
    %v1846 = vsel %vm598, %v1804, 0
    %v1849 = vsel %vm598, %v1819, 0
    %v1852 = vsel %vm598, %v1834, 0
    %v1854 = vsel %vm814, %v1842, 0
    %1856 = vmatpush.msra.mxu0 0.0
    %1857 = vmatpush.msra.mxu0 0.0
    %1858 = vmatpush.msra.mxu0 0.0
    %1859 = vmatpush.msra.mxu0 0.0
    %1860 = vmatpush.msra.mxu0 0.0
    %1861 = vmatpush.msra.mxu0 0.0
    %1862 = vmatpush.msra.mxu0 0.0
    %1863 = vmatpush.msra.mxu0 0.0
    %1864 = vmatpush.msra.mxu0 0.0
    %1865 = vmatpush.msra.mxu0 0.0
    %1866 = vmatpush.msra.mxu0 0.0
    %1867 = vmatpush.msra.mxu0 0.0
    %1868 = vmatpush.msra.mxu0 0.0
    %1869 = vmatpush.msra.mxu0 %v1854
    %1870 = vmatpush.msra.mxu0 %v1840
    %1871 = vmatpush.msra.mxu0 %v1838
    %1872 = vmatmul.f32.gmra.mxu0 %v1846
    %v1873 = vpop.f32.mrf.mxu0
    %v1874 = vadd.f32 0.0, %v1873
    %1875 = vmatmul.f32.gmra.mxu0 %v1849
    %v1876 = vpop.f32.mrf.mxu0
    %v1877 = vadd.f32 0.0, %v1876
    %1878 = vmatmul.f32.gmra.mxu0 %v1852
    %v1879 = vpop.f32.mrf.mxu0
    %v1880 = vadd.f32 0.0, %v1879
    %1881 = vdwg.mxu0
    %v1882 = vadd.f32 %v1710, %v1874
    %v1883 = vadd.f32 %v1711, %v1877
    %v1884 = vadd.f32 %v1712, %v1880
    %v1886 = vsel %vm598, %v102, 0
    %v1889 = vsel %vm814, %v1884, 0
    %1891 = vmatpush.msra.mxu0 0.0
    %1892 = vmatpush.msra.mxu0 0.0
    %1893 = vmatpush.msra.mxu0 0.0
    %1894 = vmatpush.msra.mxu0 0.0
    %1895 = vmatpush.msra.mxu0 0.0
    %1896 = vmatpush.msra.mxu0 0.0
    %1897 = vmatpush.msra.mxu0 0.0
    %1898 = vmatpush.msra.mxu0 0.0
    %1899 = vmatpush.msra.mxu0 0.0
    %1900 = vmatpush.msra.mxu0 0.0
    %1901 = vmatpush.msra.mxu0 0.0
    %1902 = vmatpush.msra.mxu0 0.0
    %1903 = vmatpush.msra.mxu0 0.0
    %1904 = vmatpush.msra.mxu0 %v1889
    %1905 = vmatpush.msra.mxu0 %v1883
    %1906 = vmatpush.msra.mxu0 %v1882
    %1907 = vmatmul.f32.gmra.mxu0 %v1886
    %v1908 = vpop.f32.mrf.mxu0
    %v1909 = vadd.f32 0.0, %v1908
    %1910 = vdwg.mxu0
    %v1911 = vld [vmem:[%s7] sm:$0xff]
    %v1912 = vld [vmem:[%s7 + $0x8] sm:$0xff]
    %v1913 = vld [vmem:[%s7 + $0x10] sm:$0xff]
    %v1914 = vld [vmem:[%s7 + $0x18] sm:$0xff]
    %v1915 = vld [vmem:[%s7 + $0x20] sm:$0xff]
    %v1916 = vld [vmem:[%s7 + $0x28] sm:$0xff]
    %v1917 = vld [vmem:[%s7 + $0x30] sm:$0xff]
    %v1918 = vld [vmem:[%s7 + $0x38] sm:$0xff]
    %v1919 = vld [vmem:[%s8] sm:$0x1]
    %v1921 = vperm.slane %v1919, 0
    %v1924 = vsel %vm152, %v1909, 0
    %1926 = vmatpush.msra.mxu0 0.0
    %1927 = vmatpush.msra.mxu0 0.0
    %1928 = vmatpush.msra.mxu0 0.0
    %1929 = vmatpush.msra.mxu0 0.0
    %1930 = vmatpush.msra.mxu0 0.0
    %1931 = vmatpush.msra.mxu0 0.0
    %1932 = vmatpush.msra.mxu0 0.0
    %1933 = vmatpush.msra.mxu0 0.0
    %1934 = vmatpush.msra.mxu0 %v1918
    %1935 = vmatpush.msra.mxu0 %v1917
    %1936 = vmatpush.msra.mxu0 %v1916
    %1937 = vmatpush.msra.mxu0 %v1915
    %1938 = vmatpush.msra.mxu0 %v1914
    %1939 = vmatpush.msra.mxu0 %v1913
    %1940 = vmatpush.msra.mxu0 %v1912
    %1941 = vmatpush.msra.mxu0 %v1911
    %1942 = vmatmul.f32.gmra.mxu0 %v1924
    %v1943 = vpop.f32.mrf.mxu0
    %v1944 = vadd.f32 %v1921, %v1943
    %1945 = vdwg.mxu0
    %vm1946 = vcmask 74752
    %1947 = vst.msk [vmem:[#allocation3] sm:$0x3] %vm1946, %v1944
    // Predicated region
    $region38: #{pallas_forward.1} parent=1 // pred_check
      _
    $region39: #{pallas_forward.1} parent=1 // pred_check_branch
      %1949 = sbr.rel (0) target = $region41
    $region40: #{pallas_forward.1} parent=1 // pred_region
      %1951 = vsyncadd [#allocation4], 0
      %s1953 = sshll.u32 [#allocation3], 4
      %s1954 = int_to_ptr.vmem [resolvable:$true] %s1953
      %s1955 = sshll.u32 %s9, 4
      %s1956 = int_to_ptr.hbm [resolvable:$true] %s1955
      %1958 = dma.vmem_to_hbm [thread:$0]  %s1954, 32, %s1956, [#allocation4]
    $region41: #{pallas_forward.1} parent=1 // pred_fallthru
      _
    // Predicated region
    $region42: #{pallas_forward.1} parent=1 // pred_check
      _
    $region43: #{pallas_forward.1} parent=1 // pred_check_branch
      %1960 = sbr.rel (0) target = $region45
    $region44: #{pallas_forward.1} parent=1 // pred_region
      %1962 = dma.done [#allocation4], 32
    $region45: #{pallas_forward.1} parent=1 // pred_fallthru
      _
    %1963 = vsyncpa [#allocation4], 1

</llo_original>
